<compile_context>
chip_gen: v7x
topology: tpu7x:2x2x1
jax: 0.10.0
libtpu: 0.0.40
codegen_flags: <defaults>
</compile_context>

<pallas_src>
import functools

import jax
import jax.numpy as jnp
from jax.experimental import pallas as pl
from jax.experimental.pallas import tpu as pltpu


def _round_up(x, m):
    return ((x + m - 1) // m) * m


def _residualnet_kernel(x_ref,
                        w1_ref, b1_ref,
                        w2_ref, b2_ref,
                        w3_ref, b3_ref,
                        o_ref):
    # x tile arrives as f32 (single HBM pass); cast to bf16 for the MXU here.
    x = x_ref[...].astype(w1_ref.dtype)

    # fc1 + ReLU   (BN1 running-stat affine already folded into w2/b2)
    h1 = jnp.dot(x, w1_ref[...],
                 preferred_element_type=jnp.float32) + b1_ref[...]
    h1 = jnp.maximum(h1, 0.0).astype(w2_ref.dtype)
    # drop1: identity in eval mode

    # fc2 + ReLU   (BN2 folded into w3/b3)
    h2 = jnp.dot(h1, w2_ref[...],
                 preferred_element_type=jnp.float32) + b2_ref[...]
    h2 = jnp.maximum(h2, 0.0).astype(w3_ref.dtype)
    # drop2: identity in eval mode

    # fc4 (output columns zero-padded to a lane-dense 128-wide slab)
    o_ref[...] = (jnp.dot(h2, w3_ref[...],
                          preferred_element_type=jnp.float32) + b3_ref[...])


def prepare_params(params, compute_dtype=jnp.bfloat16):
    """One-time (model-load) prep: fold BN into downstream weights, pad fc4 to
    128 output lanes, cast weights to the bf16 MXU dtype."""
    (w1, b1, s1, t1, w2, b2, s2, t2, w3, b3) = params

    # BN1 folded into fc2 (exact: the affine sits between ReLU and the matmul)
    w2f = s1.reshape(-1, 1) * w2
    b2f = b2 + t1 @ w2
    # BN2 folded into fc4
    w3f = s2.reshape(-1, 1) * w3
    b3f = b3 + t2 @ w3

    out_dim = w3f.shape[1]
    out_pad = _round_up(out_dim, 128)   # keep at 128; do NOT widen to MXU 256
    w3f = jnp.pad(w3f, ((0, 0), (0, out_pad - out_dim)))
    b3f = jnp.pad(b3f, ((0, 0), (0, out_pad - out_dim)))

    folded = (w1.astype(compute_dtype), b1.astype(jnp.float32),
              w2f.astype(compute_dtype), b2f.astype(jnp.float32),
              w3f.astype(compute_dtype), b3f.astype(jnp.float32))
    return folded, out_dim


@functools.partial(jax.jit, static_argnames=("out_dim", "tile_b"))
def residualnet_forward(x, folded, *, out_dim, tile_b=1024):
    """x: (B, embedding_size + num_class) float32. Returns (B, embedding_size) f32."""
    w1, b1, w2, b2, w3, b3 = folded
    B, in_dim = x.shape
    out_pad = w3.shape[1]

    # Balanced batch tiling:
    #  * amortize the ~0.35 us/grid-step overhead (big tiles),
    #  * >= 2 grid steps when B is large enough so v7x megacore can shard,
    #  * tiles sized cdiv(B, num_tiles) rounded to 8 sublanes -> pad waste < 8
    #    rows per tile instead of up to TB-1.
    num_tiles = pl.cdiv(B, tile_b)
    if B >= 64:
        num_tiles = max(num_tiles, 2)
    TB = _round_up(pl.cdiv(B, num_tiles), 8)
    num_tiles = pl.cdiv(B, TB)
    B_pad = num_tiles * TB

    x_p = x if B_pad == B else jnp.pad(x, ((0, B_pad - B), (0, 0)))

    def resident(a):
        # whole array, constant block index -> stays resident in VMEM across
        # all batch tiles (no re-DMA per grid step)
        return pl.BlockSpec(a.shape, lambda i: (0,) * a.ndim)

    out = pl.pallas_call(
        _residualnet_kernel,
        out_shape=jax.ShapeDtypeStruct((B_pad, out_pad), jnp.float32),
        grid=(num_tiles,),
        in_specs=[pl.BlockSpec((TB, in_dim), lambda i: (i, 0)),
                  resident(w1), resident(b1),
                  resident(w2), resident(b2),
                  resident(w3), resident(b3)],
        out_specs=pl.BlockSpec((TB, out_pad), lambda i: (i, 0)),
        compiler_params=pltpu.CompilerParams(
            dimension_semantics=("parallel",),
            vmem_limit_bytes=32 * 1024 * 1024),
    )(x_p, w1, b1, w2, b2, w3, b3)

    return out[:B, :out_dim]


def init_params(key, embedding_size, num_class):
    """Parameter init mirroring the PyTorch module's shapes, with RANDOM BN
    running stats / affine so the BN-fold path is actually tested."""
    in_dim = embedding_size + num_class
    dims = [(in_dim, 1024), (1024, 512), (512, embedding_size)]
    keys = jax.random.split(key, 8)

    def linear(kw, kb, fan_in, fan_out):
        bound = 1.0 / jnp.sqrt(fan_in)
        w = jax.random.uniform(kw, (fan_in, fan_out), jnp.float32, -bound, bound)
        b = jax.random.uniform(kb, (1, fan_out), jnp.float32, -bound, bound)
        return w, b

    w1, b1 = linear(keys[0], keys[1], *dims[0])
    w2, b2 = linear(keys[2], keys[3], *dims[1])
    w3, b3 = linear(keys[4], keys[5], *dims[2])

    eps = 1e-5

    def bn_fold(k, n):
        kg, kb_, km, kv = jax.random.split(k, 4)
        gamma = jax.random.uniform(kg, (1, n), jnp.float32, 0.5, 1.5)
        beta = 0.1 * jax.random.normal(kb_, (1, n), jnp.float32)
        rmean = 0.1 * jax.random.normal(km, (1, n), jnp.float32)
        rvar = jax.random.uniform(kv, (1, n), jnp.float32, 0.5, 1.5)
        scale = gamma / jnp.sqrt(rvar + eps)
        shift = beta - rmean * scale
        return scale, shift

    s1, t1 = bn_fold(keys[6], 1024)
    s2, t2 = bn_fold(keys[7], 512)
    return (w1, b1, s1, t1, w2, b2, s2, t2, w3, b3)


def reference_forward(x, params):
    """Pure-JAX f32 reference with the original (unfolded) BN affine."""
    (w1, b1, s1, t1, w2, b2, s2, t2, w3, b3) = params
    h1 = jnp.maximum(x @ w1 + b1, 0.0) * s1 + t1
    h2 = jnp.maximum(h1 @ w2 + b2, 0.0) * s2 + t2
    return h2 @ w3 + b3


if __name__ == "__main__":
    embedding_size = 32
    num_class = 8
    batch = 8

    key = jax.random.PRNGKey(0)
    kx, kp = jax.random.split(key)
    x = jax.random.normal(kx, (batch, embedding_size + num_class), jnp.float32)

    params = init_params(kp, embedding_size, num_class)
    # Model-load time: fold BN, pad, cast (hoisted out of the per-call path).
    folded, out_dim = prepare_params(params)

    out = residualnet_forward(x, folded, out_dim=out_dim)
    out = jax.block_until_ready(out)

    ref = reference_forward(x, params)
    assert out.shape == (batch, embedding_size)
    # bf16 weights/activations with f32 accumulation: loosened tolerance.
    assert jnp.allclose(out, ref, atol=5e-2, rtol=5e-2)
    print("KERNEL_OK")
</pallas_src>

<mosaic_0001>
module attributes {stable_mosaic.version = 11 : i64} {
  func.func @_residualnet_kernel(%arg0: i32, %arg1: memref<8x40xf32, #tpu.memory_space<vmem>>, %arg2: memref<40x1024xbf16, #tpu.memory_space<vmem>>, %arg3: memref<1x1024xf32, #tpu.memory_space<vmem>>, %arg4: memref<1024x512xbf16, #tpu.memory_space<vmem>>, %arg5: memref<1x512xf32, #tpu.memory_space<vmem>>, %arg6: memref<512x128xbf16, #tpu.memory_space<vmem>>, %arg7: memref<1x128xf32, #tpu.memory_space<vmem>>, %arg8: memref<8x128xf32, #tpu.memory_space<vmem>>) attributes {dimension_semantics = [#tpu.dimension_semantics<parallel>], iteration_bounds = array<i64: 1>, scalar_prefetch = 0 : i64, scratch_operands = 0 : i64, tpu.core_type = #tpu.core_type<tc>, window_params = [{transform_indices = @transform_0, window_bounds = array<i64: 8, 40>}, {pipeline_mode = #tpu.pipeline_mode<synchronous>, transform_indices = @transform_1, window_bounds = array<i64: 40, 1024>}, {pipeline_mode = #tpu.pipeline_mode<synchronous>, transform_indices = @transform_2, window_bounds = array<i64: 1, 1024>}, {pipeline_mode = #tpu.pipeline_mode<synchronous>, transform_indices = @transform_3, window_bounds = array<i64: 1024, 512>}, {pipeline_mode = #tpu.pipeline_mode<synchronous>, transform_indices = @transform_4, window_bounds = array<i64: 1, 512>}, {pipeline_mode = #tpu.pipeline_mode<synchronous>, transform_indices = @transform_5, window_bounds = array<i64: 512, 128>}, {pipeline_mode = #tpu.pipeline_mode<synchronous>, transform_indices = @transform_6, window_bounds = array<i64: 1, 128>}, {transform_indices = @transform_7, window_bounds = array<i64: 8, 128>}]} {
    %c0 = arith.constant 0 : index
    %c0_0 = arith.constant 0 : index
    %0 = vector.load %arg1[%c0, %c0_0] : memref<8x40xf32, #tpu.memory_space<vmem>>, vector<8x40xf32>
    %1 = arith.truncf %0 : vector<8x40xf32> to vector<8x40xbf16>
    %c0_1 = arith.constant 0 : index
    %c0_2 = arith.constant 0 : index
    %2 = vector.load %arg2[%c0_1, %c0_2] : memref<40x1024xbf16, #tpu.memory_space<vmem>>, vector<40x1024xbf16>
    %cst = arith.constant dense<0.000000e+00> : vector<8x1024xf32>
    %3 = tpu.matmul %1, %2, %cst {dimension_numbers = #tpu.dot_dimension_numbers<[1], [0], [0], [1], [0, 0, 1, 1], [], []>} : vector<8x40xbf16>, vector<40x1024xbf16>, vector<8x1024xf32> -> vector<8x1024xf32>
    %c0_3 = arith.constant 0 : index
    %c0_4 = arith.constant 0 : index
    %4 = vector.load %arg3[%c0_3, %c0_4] : memref<1x1024xf32, #tpu.memory_space<vmem>>, vector<1x1024xf32>
    %5 = vector.broadcast %4 : vector<1x1024xf32> to vector<8x1024xf32>
    %6 = arith.addf %3, %5 : vector<8x1024xf32>
    %cst_5 = arith.constant 0.000000e+00 : f32
    %7 = vector.broadcast %cst_5 : f32 to vector<8x1024xf32>
    %8 = arith.maximumf %6, %7 : vector<8x1024xf32>
    %9 = arith.truncf %8 : vector<8x1024xf32> to vector<8x1024xbf16>
    %c0_6 = arith.constant 0 : index
    %c0_7 = arith.constant 0 : index
    %10 = vector.load %arg4[%c0_6, %c0_7] : memref<1024x512xbf16, #tpu.memory_space<vmem>>, vector<1024x512xbf16>
    %cst_8 = arith.constant dense<0.000000e+00> : vector<8x512xf32>
    %11 = tpu.matmul %9, %10, %cst_8 {dimension_numbers = #tpu.dot_dimension_numbers<[1], [0], [0], [1], [0, 0, 1, 1], [], []>} : vector<8x1024xbf16>, vector<1024x512xbf16>, vector<8x512xf32> -> vector<8x512xf32>
    %c0_9 = arith.constant 0 : index
    %c0_10 = arith.constant 0 : index
    %12 = vector.load %arg5[%c0_9, %c0_10] : memref<1x512xf32, #tpu.memory_space<vmem>>, vector<1x512xf32>
    %13 = vector.broadcast %12 : vector<1x512xf32> to vector<8x512xf32>
    %14 = arith.addf %11, %13 : vector<8x512xf32>
    %cst_11 = arith.constant 0.000000e+00 : f32
    %15 = vector.broadcast %cst_11 : f32 to vector<8x512xf32>
    %16 = arith.maximumf %14, %15 : vector<8x512xf32>
    %17 = arith.truncf %16 : vector<8x512xf32> to vector<8x512xbf16>
    %c0_12 = arith.constant 0 : index
    %c0_13 = arith.constant 0 : index
    %18 = vector.load %arg6[%c0_12, %c0_13] : memref<512x128xbf16, #tpu.memory_space<vmem>>, vector<512x128xbf16>
    %cst_14 = arith.constant dense<0.000000e+00> : vector<8x128xf32>
    %19 = tpu.matmul %17, %18, %cst_14 {dimension_numbers = #tpu.dot_dimension_numbers<[1], [0], [0], [1], [0, 0, 1, 1], [], []>} : vector<8x512xbf16>, vector<512x128xbf16>, vector<8x128xf32> -> vector<8x128xf32>
    %c0_15 = arith.constant 0 : index
    %c0_16 = arith.constant 0 : index
    %20 = vector.load %arg7[%c0_15, %c0_16] : memref<1x128xf32, #tpu.memory_space<vmem>>, vector<1x128xf32>
    %21 = vector.broadcast %20 : vector<1x128xf32> to vector<8x128xf32>
    %22 = arith.addf %19, %21 : vector<8x128xf32>
    %c0_17 = arith.constant 0 : index
    %c0_18 = arith.constant 0 : index
    %23 = vector.load %arg8[%c0_17, %c0_18] : memref<8x128xf32, #tpu.memory_space<vmem>>, vector<8x128xf32>
    tpu.vector_store %arg8[%c0_17, %c0_18], %22 {strides = array<i32>} : memref<8x128xf32, #tpu.memory_space<vmem>>, vector<8x128xf32>,
    return
  }
  func.func @transform_0(%arg0: i32) -> (i32, i32) {
    %c0_i32 = arith.constant 0 : i32
    %c0_i32_0 = arith.constant 0 : i32
    return %arg0, %c0_i32 : i32, i32
  }
  func.func @transform_1(%arg0: i32) -> (i32, i32) {
    %c0_i32 = arith.constant 0 : i32
    %c0_i32_0 = arith.constant 0 : i32
    %c0_i32_1 = arith.constant 0 : i32
    return %c0_i32, %c0_i32_0 : i32, i32
  }
  func.func @transform_2(%arg0: i32) -> (i32, i32) {
    %c0_i32 = arith.constant 0 : i32
    %c0_i32_0 = arith.constant 0 : i32
    %c0_i32_1 = arith.constant 0 : i32
    return %c0_i32, %c0_i32_0 : i32, i32
  }
  func.func @transform_3(%arg0: i32) -> (i32, i32) {
    %c0_i32 = arith.constant 0 : i32
    %c0_i32_0 = arith.constant 0 : i32
    %c0_i32_1 = arith.constant 0 : i32
    return %c0_i32, %c0_i32_0 : i32, i32
  }
  func.func @transform_4(%arg0: i32) -> (i32, i32) {
    %c0_i32 = arith.constant 0 : i32
    %c0_i32_0 = arith.constant 0 : i32
    %c0_i32_1 = arith.constant 0 : i32
    return %c0_i32, %c0_i32_0 : i32, i32
  }
  func.func @transform_5(%arg0: i32) -> (i32, i32) {
    %c0_i32 = arith.constant 0 : i32
    %c0_i32_0 = arith.constant 0 : i32
    %c0_i32_1 = arith.constant 0 : i32
    return %c0_i32, %c0_i32_0 : i32, i32
  }
  func.func @transform_6(%arg0: i32) -> (i32, i32) {
    %c0_i32 = arith.constant 0 : i32
    %c0_i32_0 = arith.constant 0 : i32
    %c0_i32_1 = arith.constant 0 : i32
    return %c0_i32, %c0_i32_0 : i32, i32
  }
  func.func @transform_7(%arg0: i32) -> (i32, i32) {
    %c0_i32 = arith.constant 0 : i32
    %c0_i32_0 = arith.constant 0 : i32
    return %arg0, %c0_i32 : i32, i32
  }
}

</mosaic_0001>

<llo_original>
// kernel: residualnet_forward.1
$region0: #{residualnet_forward.1}
  #allocation0 [shape = 'u32[]', space=smem, size = 0x4, offset = 0x4, fixed_abs, tag = 'smem constant byte address 0x4 - core index']
  #allocation1 [shape = 'u32[144,128]{1,0:T(1,128)}', space=vmem, size = 0x12000, scoped, tag = 'internal scratch']
  %s0 = inlined_call_operand.hbm [shape: f32[8,40], index: 0, kind: input, shape index: {}]
  %s1 = inlined_call_operand.hbm [shape: bf16[40,1024], index: 1, kind: input, shape index: {}]
  %s2 = inlined_call_operand.hbm [shape: f32[1,1024], index: 2, kind: input, shape index: {}]
  %s3 = inlined_call_operand.hbm [shape: bf16[1024,512], index: 3, kind: input, shape index: {}]
  %s4 = inlined_call_operand.vmem [shape: f32[1,512], index: 4, kind: input, shape index: {}]
  %s5 = inlined_call_operand.hbm [shape: bf16[512,128], index: 5, kind: input, shape index: {}]
  %s6 = inlined_call_operand.vmem [shape: f32[1,128], index: 6, kind: input, shape index: {}]
  %s7 = inlined_call_operand.hbm [shape: f32[8,128], index: 7, kind: output, shape index: {}]
  %s8 = sld [smem:[#allocation0]]
  $region58: #{residualnet_forward.1} parent=0
    _
  %s10 = ssub.s32 1, %s8
  %s11 = scalar_select 0, %s10, %s8
  $region1: #{residualnet_forward.1} parent=0
    #allocation2 [shape = 'u8[4096]{0}', space=vmem, size = 0x1000, scoped, tag = 'input window, operand 0, single buffered']
    #allocation3 [shape = 's32[1]{0}', space=sflag, size = 0x4, scoped, tag = 'scoped memory for residualnet_forward.1']
    #allocation4 [shape = 's32[1]{0}', space=sflag, size = 0x4, scoped, tag = 'scoped memory for residualnet_forward.1']
    #allocation5 [shape = 'u8[81920]{0}', space=vmem, size = 0x14000, scoped, tag = 'input window, operand 1, single buffered']
    #allocation6 [shape = 's32[1]{0}', space=sflag, size = 0x4, scoped, tag = 'scoped memory for residualnet_forward.1']
    #allocation7 [shape = 'u8[4096]{0}', space=vmem, size = 0x1000, scoped, tag = 'input window, operand 2, single buffered']
    #allocation8 [shape = 'u8[1048576]{0}', space=vmem, size = 0x100000, scoped, tag = 'input window, operand 3, single buffered']
    #allocation9 [shape = 's32[1]{0}', space=sflag, size = 0x4, scoped, tag = 'scoped memory for residualnet_forward.1']
    #allocation10 [shape = 'u8[131072]{0}', space=vmem, size = 0x20000, scoped, tag = 'input window, operand 5, single buffered']
    #allocation11 [shape = 'u8[4096]{0}', space=vmem, size = 0x1000, scoped, tag = 'output window, operand 0, single buffered']
    %12 = vsyncpa [#allocation3], 0
    %13 = vsyncpa [#allocation6], 0
    %14 = vsyncpa [#allocation9], 0
    %15 = vsyncpa [#allocation4], 0
    // Predicated region
    $region2: #{residualnet_forward.1} parent=1 // pred_check
      _
    $region3: #{residualnet_forward.1} parent=1 // pred_check_branch
      %17 = sbr.rel (0) target = $region5
    $region4: #{residualnet_forward.1} parent=1 // pred_region
      %s19 = ssub.s32 128, 128
      %20 = vsyncadd [#allocation3], %s19
      %s22 = sshll.u32 [#allocation2], 4
      %s23 = int_to_ptr.vmem [resolvable:$true] %s22
      %25 = dma.hbm_to_vmem [thread:$0]  %s0, 128, %s23, [#allocation3]
    $region5: #{residualnet_forward.1} parent=1 // pred_fallthru
      _
    // Predicated region
    $region6: #{residualnet_forward.1} parent=1 // pred_check
      _
    $region7: #{residualnet_forward.1} parent=1 // pred_check_branch
      %27 = sbr.rel (0) target = $region9
    $region8: #{residualnet_forward.1} parent=1 // pred_region
      %s29 = ssub.s32 2560, 2560
      %30 = vsyncadd [#allocation6], %s29
      %s31 = sshll.u32 [#allocation5], 4
      %s32 = int_to_ptr.vmem [resolvable:$true] %s31
      %37 = dma.hbm_to_vmem [thread:$0]  %s1, 2560, %s32, [#allocation6], 512, 512, 32
    $region9: #{residualnet_forward.1} parent=1 // pred_fallthru
      _
    // Predicated region
    $region10: #{residualnet_forward.1} parent=1 // pred_check
      _
    $region11: #{residualnet_forward.1} parent=1 // pred_check_branch
      %39 = sbr.rel (0) target = $region13
    $region12: #{residualnet_forward.1} parent=1 // pred_region
      %s41 = ssub.s32 128, 128
      %42 = vsyncadd [#allocation6], %s41
      %s44 = sshll.u32 [#allocation7], 4
      %s45 = int_to_ptr.vmem [resolvable:$true] %s44
      %47 = dma.hbm_to_vmem [thread:$0]  %s2, 128, %s45, [#allocation6]
    $region13: #{residualnet_forward.1} parent=1 // pred_fallthru
      _
    // Predicated region
    $region14: #{residualnet_forward.1} parent=1 // pred_check
      _
    $region15: #{residualnet_forward.1} parent=1 // pred_check_branch
      %49 = sbr.rel (0) target = $region17
    $region16: #{residualnet_forward.1} parent=1 // pred_region
      %s51 = ssub.s32 32768, 32768
      %52 = vsyncadd [#allocation9], %s51
      %s53 = sshll.u32 [#allocation8], 4
      %s54 = int_to_ptr.vmem [resolvable:$true] %s53
      %59 = dma.hbm_to_vmem [thread:$0]  %s3, 32768, %s54, [#allocation9], 256, 256, 16
    $region17: #{residualnet_forward.1} parent=1 // pred_fallthru
      _
    // Predicated region
    $region18: #{residualnet_forward.1} parent=1 // pred_check
      _
    $region19: #{residualnet_forward.1} parent=1 // pred_check_branch
      %61 = sbr.rel (0) target = $region21
    $region20: #{residualnet_forward.1} parent=1 // pred_region
      _
    $region21: #{residualnet_forward.1} parent=1 // pred_fallthru
      _
    // Predicated region
    $region22: #{residualnet_forward.1} parent=1 // pred_check
      _
    $region23: #{residualnet_forward.1} parent=1 // pred_check_branch
      %63 = sbr.rel (0) target = $region25
    $region24: #{residualnet_forward.1} parent=1 // pred_region
      %s65 = ssub.s32 4096, 4096
      %66 = vsyncadd [#allocation9], %s65
      %s67 = sshll.u32 [#allocation10], 4
      %s68 = int_to_ptr.vmem [resolvable:$true] %s67
      %73 = dma.hbm_to_vmem [thread:$0]  %s5, 4096, %s68, [#allocation9], 64, 64, 4
    $region25: #{residualnet_forward.1} parent=1 // pred_fallthru
      _
    // Predicated region
    $region26: #{residualnet_forward.1} parent=1 // pred_check
      _
    $region27: #{residualnet_forward.1} parent=1 // pred_check_branch
      %75 = sbr.rel (0) target = $region29
    $region28: #{residualnet_forward.1} parent=1 // pred_region
      _
    $region29: #{residualnet_forward.1} parent=1 // pred_fallthru
      _
    // Predicated region
    $region30: #{residualnet_forward.1} parent=1 // pred_check
      _
    $region31: #{residualnet_forward.1} parent=1 // pred_check_branch
      %77 = sbr.rel (0) target = $region33
    $region32: #{residualnet_forward.1} parent=1 // pred_region
      %78 = dma.done [#allocation3], 128
    $region33: #{residualnet_forward.1} parent=1 // pred_fallthru
      _
    // Predicated region
    $region34: #{residualnet_forward.1} parent=1 // pred_check
      _
    $region35: #{residualnet_forward.1} parent=1 // pred_check_branch
      %80 = sbr.rel (0) target = $region37
    $region36: #{residualnet_forward.1} parent=1 // pred_region
      %81 = dma.done [#allocation6], 2560
    $region37: #{residualnet_forward.1} parent=1 // pred_fallthru
      _
    // Predicated region
    $region38: #{residualnet_forward.1} parent=1 // pred_check
      _
    $region39: #{residualnet_forward.1} parent=1 // pred_check_branch
      %83 = sbr.rel (0) target = $region41
    $region40: #{residualnet_forward.1} parent=1 // pred_region
      %84 = dma.done [#allocation6], 128
    $region41: #{residualnet_forward.1} parent=1 // pred_fallthru
      _
    // Predicated region
    $region42: #{residualnet_forward.1} parent=1 // pred_check
      _
    $region43: #{residualnet_forward.1} parent=1 // pred_check_branch
      %86 = sbr.rel (0) target = $region45
    $region44: #{residualnet_forward.1} parent=1 // pred_region
      %87 = dma.done [#allocation9], 32768
    $region45: #{residualnet_forward.1} parent=1 // pred_fallthru
      _
    // Predicated region
    $region46: #{residualnet_forward.1} parent=1 // pred_check
      _
    $region47: #{residualnet_forward.1} parent=1 // pred_check_branch
      %89 = sbr.rel (0) target = $region49
    $region48: #{residualnet_forward.1} parent=1 // pred_region
      %90 = dma.done [#allocation9], 4096
    $region49: #{residualnet_forward.1} parent=1 // pred_fallthru
      _
    %v92 = vld [vmem:[#allocation2] sm:$0xff]
    %v93 = vpack.c.bf16 %v92, %v92
    %v94 = vld [vmem:[#allocation5] sm:$0xff]
    %v95 = vld [vmem:[#allocation5 + $0x8] sm:$0xff]
    %v96 = vld [vmem:[#allocation5 + $0x10] sm:$0xff]
    %v97 = vld [vmem:[#allocation5 + $0x18] sm:$0xff]
    %v98 = vld [vmem:[#allocation5 + $0x20] sm:$0xff]
    %v99 = vld [vmem:[#allocation5 + $0x28] sm:$0xff]
    %v100 = vld [vmem:[#allocation5 + $0x30] sm:$0xff]
    %v101 = vld [vmem:[#allocation5 + $0x38] sm:$0xff]
    %v102 = vld [vmem:[#allocation5 + $0x40] sm:$0xff]
    %v103 = vld [vmem:[#allocation5 + $0x48] sm:$0xff]
    %v104 = vld [vmem:[#allocation5 + $0x50] sm:$0xff]
    %v105 = vld [vmem:[#allocation5 + $0x58] sm:$0xff]
    %v106 = vld [vmem:[#allocation5 + $0x60] sm:$0xff]
    %v107 = vld [vmem:[#allocation5 + $0x68] sm:$0xff]
    %v108 = vld [vmem:[#allocation5 + $0x70] sm:$0xff]
    %v109 = vld [vmem:[#allocation5 + $0x78] sm:$0xff]
    %v110 = vld [vmem:[#allocation5 + $0x80] sm:$0xff]
    %v111 = vld [vmem:[#allocation5 + $0x88] sm:$0xff]
    %v112 = vld [vmem:[#allocation5 + $0x90] sm:$0xff]
    %v113 = vld [vmem:[#allocation5 + $0x98] sm:$0xff]
    %v114 = vld [vmem:[#allocation7] sm:$0xff]
    %v116 = vlaneseq
    %v117 = vshrl.u32 %v116, 7
    %v118 = vsub.s32 0, %v117
    %v119 = vrot.slane %v114, %v118
    %v120 = vlaneseq
    %v121 = vshrl.u32 %v120, 7
    %v122 = vsub.s32 1, %v121
    %v123 = vrot.slane %v114, %v122
    %v124 = vlaneseq
    %v125 = vshrl.u32 %v124, 7
    %v126 = vsub.s32 2, %v125
    %v127 = vrot.slane %v114, %v126
    %v128 = vlaneseq
    %v129 = vshrl.u32 %v128, 7
    %v130 = vsub.s32 3, %v129
    %v131 = vrot.slane %v114, %v130
    %v132 = vlaneseq
    %v133 = vshrl.u32 %v132, 7
    %v134 = vsub.s32 4, %v133
    %v135 = vrot.slane %v114, %v134
    %v136 = vlaneseq
    %v137 = vshrl.u32 %v136, 7
    %v138 = vsub.s32 5, %v137
    %v139 = vrot.slane %v114, %v138
    %v140 = vlaneseq
    %v141 = vshrl.u32 %v140, 7
    %v142 = vsub.s32 6, %v141
    %v143 = vrot.slane %v114, %v142
    %v144 = vlaneseq
    %v145 = vshrl.u32 %v144, 7
    %v146 = vsub.s32 7, %v145
    %v147 = vrot.slane %v114, %v146
    %v176 = vunpack.c.l.b16 %v94
    %v177 = vunpack.c.h.b16 %v94
    %v178 = vunpack.c.l.b16 %v95
    %v179 = vunpack.c.h.b16 %v95
    %v180 = vunpack.c.l.b16 %v96
    %v181 = vunpack.c.h.b16 %v96
    %v182 = vunpack.c.l.b16 %v97
    %v183 = vunpack.c.h.b16 %v97
    %v184 = vunpack.c.l.b16 %v98
    %v185 = vunpack.c.h.b16 %v98
    %v186 = vunpack.c.l.b16 %v99
    %v187 = vunpack.c.h.b16 %v99
    %v188 = vunpack.c.l.b16 %v100
    %v189 = vunpack.c.h.b16 %v100
    %v190 = vunpack.c.l.b16 %v101
    %v191 = vunpack.c.h.b16 %v101
    %v192 = vunpack.c.l.b16 %v102
    %v193 = vunpack.c.h.b16 %v102
    %v194 = vunpack.c.l.b16 %v103
    %v195 = vunpack.c.h.b16 %v103
    %v196 = vunpack.c.l.b16 %v104
    %v197 = vunpack.c.h.b16 %v104
    %v198 = vunpack.c.l.b16 %v105
    %v199 = vunpack.c.h.b16 %v105
    %v200 = vunpack.c.l.b16 %v106
    %v201 = vunpack.c.h.b16 %v106
    %v202 = vunpack.c.l.b16 %v107
    %v203 = vunpack.c.h.b16 %v107
    %v204 = vunpack.c.l.b16 %v108
    %v205 = vunpack.c.h.b16 %v108
    %v206 = vunpack.c.l.b16 %v109
    %v207 = vunpack.c.h.b16 %v109
    %v208 = vunpack.c.l.b16 %v110
    %v209 = vunpack.c.h.b16 %v110
    %v210 = vunpack.c.l.b16 %v111
    %v211 = vunpack.c.h.b16 %v111
    %v212 = vunpack.c.l.b16 %v112
    %v213 = vunpack.c.h.b16 %v112
    %v214 = vunpack.c.l.b16 %v113
    %v215 = vunpack.c.h.b16 %v113
    %v216 = vpack.c.b16 %v184, %v176
    %v217 = vpack.c.b16 %v185, %v177
    %v218 = vpack.c.b16 %v186, %v178
    %v219 = vpack.c.b16 %v187, %v179
    %v220 = vpack.c.b16 %v188, %v180
    %v221 = vpack.c.b16 %v189, %v181
    %v222 = vpack.c.b16 %v190, %v182
    %v223 = vpack.c.b16 %v191, %v183
    %v224 = vpack.c.b16 %v200, %v192
    %v225 = vpack.c.b16 %v201, %v193
    %v226 = vpack.c.b16 %v202, %v194
    %v227 = vpack.c.b16 %v203, %v195
    %v228 = vpack.c.b16 %v204, %v196
    %v229 = vpack.c.b16 %v205, %v197
    %v230 = vpack.c.b16 %v206, %v198
    %v231 = vpack.c.b16 %v207, %v199
    %v232 = vpack.c.b16 %v208, %v208
    %v233 = vpack.c.b16 %v209, %v209
    %v234 = vpack.c.b16 %v210, %v210
    %v235 = vpack.c.b16 %v211, %v211
    %v236 = vpack.c.b16 %v212, %v212
    %v237 = vpack.c.b16 %v213, %v213
    %v238 = vpack.c.b16 %v214, %v214
    %v239 = vpack.c.b16 %v215, %v215
    %vm256 = vcmask 326656
    %v258 = vsel %vm256, %v93, 0
    %vm260 = vcmask 1043456
    %v262 = vsel %vm260, %v232, 0
    %v265 = vsel %vm260, %v233, 0
    %v268 = vsel %vm260, %v234, 0
    %v271 = vsel %vm260, %v235, 0
    %v274 = vsel %vm260, %v236, 0
    %v277 = vsel %vm260, %v237, 0
    %v280 = vsel %vm260, %v238, 0
    %v283 = vsel %vm260, %v239, 0
    %285 = vmatprep.subr.bf16.mxu0 %v217
    %286 = vmatpush1.bf16.msra.mxu0 %v216
    %287 = vmatprep.subr.bf16.mxu0 %v225
    %288 = vmatpush1.bf16.msra.mxu0 %v224
    %289 = vmatprep.subr.bf16.mxu0 %v265
    %290 = vmatpush1.bf16.msra.mxu0 %v262
    %291 = vmatprep.subr.bf16.mxu0 0
    %292 = vmatpush1.bf16.msra.mxu0 0
    %293 = vmatprep.subr.bf16.mxu0 0
    %294 = vmatpush1.bf16.msra.mxu0 0
    %295 = vmatprep.subr.bf16.mxu0 0
    %296 = vmatpush1.bf16.msra.mxu0 0
    %297 = vmatprep.subr.bf16.mxu0 0
    %298 = vmatpush1.bf16.msra.mxu0 0
    %299 = vmatprep.subr.bf16.mxu0 0
    %300 = vmatpush1.bf16.msra.mxu0 0
    %301 = vmatprep.subr.bf16.mxu0 0
    %302 = vmatpush1.bf16.msra.mxu0 0
    %303 = vmatprep.subr.bf16.mxu0 0
    %304 = vmatpush1.bf16.msra.mxu0 0
    %305 = vmatprep.subr.bf16.mxu0 0
    %306 = vmatpush1.bf16.msra.mxu0 0
    %307 = vmatprep.subr.bf16.mxu0 0
    %308 = vmatpush1.bf16.msra.mxu0 0
    %309 = vmatprep.subr.bf16.mxu0 0
    %310 = vmatpush1.bf16.msra.mxu0 0
    %311 = vmatprep.subr.bf16.mxu0 0
    %312 = vmatpush1.bf16.msra.mxu0 0
    %313 = vmatprep.subr.bf16.mxu0 0
    %314 = vmatpush1.bf16.msra.mxu0 0
    %315 = vmatprep.subr.bf16.mxu0 0
    %316 = vmatpush1.bf16.msra.mxu0 0
    %317 = vmatprep.mubr.bf16.mxu0 0
    %318 = vmatmul.mubr.bf16.gmra.mrb[0].mxu0 %v258
    %v319 = vpop.f32.mrb[0].mxu0
    %v320 = vadd.f32 %v119, %v319
    %v321 = vpop.f32.mrb[0].mxu0
    %v322 = vadd.f32 %v123, %v321
    %v323 = vpop.f32.mrb[0].mxu0
    %v324 = vpop.f32.mrb[0].mxu0
    %325 = vdwg.mxu0
    %326 = vmatprep.subr.bf16.mxu0 %v219
    %327 = vmatpush1.bf16.msra.mxu0 %v218
    %328 = vmatprep.subr.bf16.mxu0 %v227
    %329 = vmatpush1.bf16.msra.mxu0 %v226
    %330 = vmatprep.subr.bf16.mxu0 %v271
    %331 = vmatpush1.bf16.msra.mxu0 %v268
    %332 = vmatprep.subr.bf16.mxu0 0
    %333 = vmatpush1.bf16.msra.mxu0 0
    %334 = vmatprep.subr.bf16.mxu0 0
    %335 = vmatpush1.bf16.msra.mxu0 0
    %336 = vmatprep.subr.bf16.mxu0 0
    %337 = vmatpush1.bf16.msra.mxu0 0
    %338 = vmatprep.subr.bf16.mxu0 0
    %339 = vmatpush1.bf16.msra.mxu0 0
    %340 = vmatprep.subr.bf16.mxu0 0
    %341 = vmatpush1.bf16.msra.mxu0 0
    %342 = vmatprep.subr.bf16.mxu0 0
    %343 = vmatpush1.bf16.msra.mxu0 0
    %344 = vmatprep.subr.bf16.mxu0 0
    %345 = vmatpush1.bf16.msra.mxu0 0
    %346 = vmatprep.subr.bf16.mxu0 0
    %347 = vmatpush1.bf16.msra.mxu0 0
    %348 = vmatprep.subr.bf16.mxu0 0
    %349 = vmatpush1.bf16.msra.mxu0 0
    %350 = vmatprep.subr.bf16.mxu0 0
    %351 = vmatpush1.bf16.msra.mxu0 0
    %352 = vmatprep.subr.bf16.mxu0 0
    %353 = vmatpush1.bf16.msra.mxu0 0
    %354 = vmatprep.subr.bf16.mxu0 0
    %355 = vmatpush1.bf16.msra.mxu0 0
    %356 = vmatprep.subr.bf16.mxu0 0
    %357 = vmatpush1.bf16.msra.mxu0 0
    %358 = vmatprep.mubr.bf16.mxu0 0
    %359 = vmatmul.mubr.bf16.gmra.mrb[0].mxu0 %v258
    %v360 = vpop.f32.mrb[0].mxu0
    %v361 = vadd.f32 %v127, %v360
    %v362 = vpop.f32.mrb[0].mxu0
    %v363 = vadd.f32 %v131, %v362
    %v364 = vpop.f32.mrb[0].mxu0
    %v365 = vpop.f32.mrb[0].mxu0
    %366 = vdwg.mxu0
    %367 = vmatprep.subr.bf16.mxu0 %v221
    %368 = vmatpush1.bf16.msra.mxu0 %v220
    %369 = vmatprep.subr.bf16.mxu0 %v229
    %370 = vmatpush1.bf16.msra.mxu0 %v228
    %371 = vmatprep.subr.bf16.mxu0 %v277
    %372 = vmatpush1.bf16.msra.mxu0 %v274
    %373 = vmatprep.subr.bf16.mxu0 0
    %374 = vmatpush1.bf16.msra.mxu0 0
    %375 = vmatprep.subr.bf16.mxu0 0
    %376 = vmatpush1.bf16.msra.mxu0 0
    %377 = vmatprep.subr.bf16.mxu0 0
    %378 = vmatpush1.bf16.msra.mxu0 0
    %379 = vmatprep.subr.bf16.mxu0 0
    %380 = vmatpush1.bf16.msra.mxu0 0
    %381 = vmatprep.subr.bf16.mxu0 0
    %382 = vmatpush1.bf16.msra.mxu0 0
    %383 = vmatprep.subr.bf16.mxu0 0
    %384 = vmatpush1.bf16.msra.mxu0 0
    %385 = vmatprep.subr.bf16.mxu0 0
    %386 = vmatpush1.bf16.msra.mxu0 0
    %387 = vmatprep.subr.bf16.mxu0 0
    %388 = vmatpush1.bf16.msra.mxu0 0
    %389 = vmatprep.subr.bf16.mxu0 0
    %390 = vmatpush1.bf16.msra.mxu0 0
    %391 = vmatprep.subr.bf16.mxu0 0
    %392 = vmatpush1.bf16.msra.mxu0 0
    %393 = vmatprep.subr.bf16.mxu0 0
    %394 = vmatpush1.bf16.msra.mxu0 0
    %395 = vmatprep.subr.bf16.mxu0 0
    %396 = vmatpush1.bf16.msra.mxu0 0
    %397 = vmatprep.subr.bf16.mxu0 0
    %398 = vmatpush1.bf16.msra.mxu0 0
    %399 = vmatprep.mubr.bf16.mxu0 0
    %400 = vmatmul.mubr.bf16.gmra.mrb[0].mxu0 %v258
    %v401 = vpop.f32.mrb[0].mxu0
    %v402 = vadd.f32 %v135, %v401
    %v403 = vpop.f32.mrb[0].mxu0
    %v404 = vadd.f32 %v139, %v403
    %v405 = vpop.f32.mrb[0].mxu0
    %v406 = vpop.f32.mrb[0].mxu0
    %407 = vdwg.mxu0
    %408 = vmatprep.subr.bf16.mxu0 %v223
    %409 = vmatpush1.bf16.msra.mxu0 %v222
    %410 = vmatprep.subr.bf16.mxu0 %v231
    %411 = vmatpush1.bf16.msra.mxu0 %v230
    %412 = vmatprep.subr.bf16.mxu0 %v283
    %413 = vmatpush1.bf16.msra.mxu0 %v280
    %414 = vmatprep.subr.bf16.mxu0 0
    %415 = vmatpush1.bf16.msra.mxu0 0
    %416 = vmatprep.subr.bf16.mxu0 0
    %417 = vmatpush1.bf16.msra.mxu0 0
    %418 = vmatprep.subr.bf16.mxu0 0
    %419 = vmatpush1.bf16.msra.mxu0 0
    %420 = vmatprep.subr.bf16.mxu0 0
    %421 = vmatpush1.bf16.msra.mxu0 0
    %422 = vmatprep.subr.bf16.mxu0 0
    %423 = vmatpush1.bf16.msra.mxu0 0
    %424 = vmatprep.subr.bf16.mxu0 0
    %425 = vmatpush1.bf16.msra.mxu0 0
    %426 = vmatprep.subr.bf16.mxu0 0
    %427 = vmatpush1.bf16.msra.mxu0 0
    %428 = vmatprep.subr.bf16.mxu0 0
    %429 = vmatpush1.bf16.msra.mxu0 0
    %430 = vmatprep.subr.bf16.mxu0 0
    %431 = vmatpush1.bf16.msra.mxu0 0
    %432 = vmatprep.subr.bf16.mxu0 0
    %433 = vmatpush1.bf16.msra.mxu0 0
    %434 = vmatprep.subr.bf16.mxu0 0
    %435 = vmatpush1.bf16.msra.mxu0 0
    %436 = vmatprep.subr.bf16.mxu0 0
    %437 = vmatpush1.bf16.msra.mxu0 0
    %438 = vmatprep.subr.bf16.mxu0 0
    %439 = vmatpush1.bf16.msra.mxu0 0
    %440 = vmatprep.mubr.bf16.mxu0 0
    %441 = vmatmul.mubr.bf16.gmra.mrb[0].mxu0 %v258
    %v442 = vpop.f32.mrb[0].mxu0
    %v443 = vadd.f32 %v143, %v442
    %v444 = vpop.f32.mrb[0].mxu0
    %v445 = vadd.f32 %v147, %v444
    %v446 = vpop.f32.mrb[0].mxu0
    %v447 = vpop.f32.mrb[0].mxu0
    %448 = vdwg.mxu0
    %v449 = vmax.f32 %v320, 0.0
    %v450 = vmax.f32 %v322, 0.0
    %v451 = vmax.f32 %v361, 0.0
    %v452 = vmax.f32 %v363, 0.0
    %v453 = vmax.f32 %v402, 0.0
    %v454 = vmax.f32 %v404, 0.0
    %v455 = vmax.f32 %v443, 0.0
    %v456 = vmax.f32 %v445, 0.0
    %v457 = vpack.c.bf16 %v449, %v449
    %v458 = vpack.c.bf16 %v450, %v450
    %v459 = vpack.c.bf16 %v451, %v451
    %v460 = vpack.c.bf16 %v452, %v452
    %v461 = vpack.c.bf16 %v453, %v453
    %v462 = vpack.c.bf16 %v454, %v454
    %v463 = vpack.c.bf16 %v455, %v455
    %v464 = vpack.c.bf16 %v456, %v456
    %v465 = vld [vmem:[#allocation8] sm:$0xff]
    %v466 = vld [vmem:[#allocation8 + $0x8] sm:$0xff]
    %v467 = vld [vmem:[#allocation8 + $0x10] sm:$0xff]
    %v468 = vld [vmem:[#allocation8 + $0x18] sm:$0xff]
    %v469 = vld [vmem:[#allocation8 + $0x20] sm:$0xff]
    %v470 = vld [vmem:[#allocation8 + $0x28] sm:$0xff]
    %v471 = vld [vmem:[#allocation8 + $0x30] sm:$0xff]
    %v472 = vld [vmem:[#allocation8 + $0x38] sm:$0xff]
    %v473 = vld [vmem:[#allocation8 + $0x40] sm:$0xff]
    %v474 = vld [vmem:[#allocation8 + $0x48] sm:$0xff]
    %v475 = vld [vmem:[#allocation8 + $0x50] sm:$0xff]
    %v476 = vld [vmem:[#allocation8 + $0x58] sm:$0xff]
    %v477 = vld [vmem:[#allocation8 + $0x60] sm:$0xff]
    %v478 = vld [vmem:[#allocation8 + $0x68] sm:$0xff]
    %v479 = vld [vmem:[#allocation8 + $0x70] sm:$0xff]
    %v480 = vld [vmem:[#allocation8 + $0x78] sm:$0xff]
    %v481 = vld [vmem:[#allocation8 + $0x80] sm:$0xff]
    %v482 = vld [vmem:[#allocation8 + $0x88] sm:$0xff]
    %v483 = vld [vmem:[#allocation8 + $0x90] sm:$0xff]
    %v484 = vld [vmem:[#allocation8 + $0x98] sm:$0xff]
    %v485 = vld [vmem:[#allocation8 + $0xa0] sm:$0xff]
    %v486 = vld [vmem:[#allocation8 + $0xa8] sm:$0xff]
    %v487 = vld [vmem:[#allocation8 + $0xb0] sm:$0xff]
    %v488 = vld [vmem:[#allocation8 + $0xb8] sm:$0xff]
    %v489 = vld [vmem:[#allocation8 + $0xc0] sm:$0xff]
    %v490 = vld [vmem:[#allocation8 + $0xc8] sm:$0xff]
    %v491 = vld [vmem:[#allocation8 + $0xd0] sm:$0xff]
    %v492 = vld [vmem:[#allocation8 + $0xd8] sm:$0xff]
    %v493 = vld [vmem:[#allocation8 + $0xe0] sm:$0xff]
    %v494 = vld [vmem:[#allocation8 + $0xe8] sm:$0xff]
    %v495 = vld [vmem:[#allocation8 + $0xf0] sm:$0xff]
    %v496 = vld [vmem:[#allocation8 + $0xf8] sm:$0xff]
    %v497 = vld [vmem:[#allocation8 + $0x100] sm:$0xff]
    %v498 = vld [vmem:[#allocation8 + $0x108] sm:$0xff]
    %v499 = vld [vmem:[#allocation8 + $0x110] sm:$0xff]
    %v500 = vld [vmem:[#allocation8 + $0x118] sm:$0xff]
    %v501 = vld [vmem:[#allocation8 + $0x120] sm:$0xff]
    %v502 = vld [vmem:[#allocation8 + $0x128] sm:$0xff]
    %v503 = vld [vmem:[#allocation8 + $0x130] sm:$0xff]
    %v504 = vld [vmem:[#allocation8 + $0x138] sm:$0xff]
    %v505 = vld [vmem:[#allocation8 + $0x140] sm:$0xff]
    %v506 = vld [vmem:[#allocation8 + $0x148] sm:$0xff]
    %v507 = vld [vmem:[#allocation8 + $0x150] sm:$0xff]
    %v508 = vld [vmem:[#allocation8 + $0x158] sm:$0xff]
    %v509 = vld [vmem:[#allocation8 + $0x160] sm:$0xff]
    %v510 = vld [vmem:[#allocation8 + $0x168] sm:$0xff]
    %v511 = vld [vmem:[#allocation8 + $0x170] sm:$0xff]
    %v512 = vld [vmem:[#allocation8 + $0x178] sm:$0xff]
    %v513 = vld [vmem:[#allocation8 + $0x180] sm:$0xff]
    %v514 = vld [vmem:[#allocation8 + $0x188] sm:$0xff]
    %v515 = vld [vmem:[#allocation8 + $0x190] sm:$0xff]
    %v516 = vld [vmem:[#allocation8 + $0x198] sm:$0xff]
    %v517 = vld [vmem:[#allocation8 + $0x1a0] sm:$0xff]
    %v518 = vld [vmem:[#allocation8 + $0x1a8] sm:$0xff]
    %v519 = vld [vmem:[#allocation8 + $0x1b0] sm:$0xff]
    %v520 = vld [vmem:[#allocation8 + $0x1b8] sm:$0xff]
    %v521 = vld [vmem:[#allocation8 + $0x1c0] sm:$0xff]
    %v522 = vld [vmem:[#allocation8 + $0x1c8] sm:$0xff]
    %v523 = vld [vmem:[#allocation8 + $0x1d0] sm:$0xff]
    %v524 = vld [vmem:[#allocation8 + $0x1d8] sm:$0xff]
    %v525 = vld [vmem:[#allocation8 + $0x1e0] sm:$0xff]
    %v526 = vld [vmem:[#allocation8 + $0x1e8] sm:$0xff]
    %v527 = vld [vmem:[#allocation8 + $0x1f0] sm:$0xff]
    %v528 = vld [vmem:[#allocation8 + $0x1f8] sm:$0xff]
    %v529 = vld [vmem:[#allocation8 + $0x200] sm:$0xff]
    %v530 = vld [vmem:[#allocation8 + $0x208] sm:$0xff]
    %v531 = vld [vmem:[#allocation8 + $0x210] sm:$0xff]
    %v532 = vld [vmem:[#allocation8 + $0x218] sm:$0xff]
    %v533 = vld [vmem:[#allocation8 + $0x220] sm:$0xff]
    %v534 = vld [vmem:[#allocation8 + $0x228] sm:$0xff]
    %v535 = vld [vmem:[#allocation8 + $0x230] sm:$0xff]
    %v536 = vld [vmem:[#allocation8 + $0x238] sm:$0xff]
    %v537 = vld [vmem:[#allocation8 + $0x240] sm:$0xff]
    %v538 = vld [vmem:[#allocation8 + $0x248] sm:$0xff]
    %v539 = vld [vmem:[#allocation8 + $0x250] sm:$0xff]
    %v540 = vld [vmem:[#allocation8 + $0x258] sm:$0xff]
    %v541 = vld [vmem:[#allocation8 + $0x260] sm:$0xff]
    %v542 = vld [vmem:[#allocation8 + $0x268] sm:$0xff]
    %v543 = vld [vmem:[#allocation8 + $0x270] sm:$0xff]
    %v544 = vld [vmem:[#allocation8 + $0x278] sm:$0xff]
    %v545 = vld [vmem:[#allocation8 + $0x280] sm:$0xff]
    %v546 = vld [vmem:[#allocation8 + $0x288] sm:$0xff]
    %v547 = vld [vmem:[#allocation8 + $0x290] sm:$0xff]
    %v548 = vld [vmem:[#allocation8 + $0x298] sm:$0xff]
    %v549 = vld [vmem:[#allocation8 + $0x2a0] sm:$0xff]
    %v550 = vld [vmem:[#allocation8 + $0x2a8] sm:$0xff]
    %v551 = vld [vmem:[#allocation8 + $0x2b0] sm:$0xff]
    %v552 = vld [vmem:[#allocation8 + $0x2b8] sm:$0xff]
    %v553 = vld [vmem:[#allocation8 + $0x2c0] sm:$0xff]
    %v554 = vld [vmem:[#allocation8 + $0x2c8] sm:$0xff]
    %v555 = vld [vmem:[#allocation8 + $0x2d0] sm:$0xff]
    %v556 = vld [vmem:[#allocation8 + $0x2d8] sm:$0xff]
    %v557 = vld [vmem:[#allocation8 + $0x2e0] sm:$0xff]
    %v558 = vld [vmem:[#allocation8 + $0x2e8] sm:$0xff]
    %v559 = vld [vmem:[#allocation8 + $0x2f0] sm:$0xff]
    %v560 = vld [vmem:[#allocation8 + $0x2f8] sm:$0xff]
    %v561 = vld [vmem:[#allocation8 + $0x300] sm:$0xff]
    %v562 = vld [vmem:[#allocation8 + $0x308] sm:$0xff]
    %v563 = vld [vmem:[#allocation8 + $0x310] sm:$0xff]
    %v564 = vld [vmem:[#allocation8 + $0x318] sm:$0xff]
    %v565 = vld [vmem:[#allocation8 + $0x320] sm:$0xff]
    %v566 = vld [vmem:[#allocation8 + $0x328] sm:$0xff]
    %v567 = vld [vmem:[#allocation8 + $0x330] sm:$0xff]
    %v568 = vld [vmem:[#allocation8 + $0x338] sm:$0xff]
    %v569 = vld [vmem:[#allocation8 + $0x340] sm:$0xff]
    %v570 = vld [vmem:[#allocation8 + $0x348] sm:$0xff]
    %v571 = vld [vmem:[#allocation8 + $0x350] sm:$0xff]
    %v572 = vld [vmem:[#allocation8 + $0x358] sm:$0xff]
    %v573 = vld [vmem:[#allocation8 + $0x360] sm:$0xff]
    %v574 = vld [vmem:[#allocation8 + $0x368] sm:$0xff]
    %v575 = vld [vmem:[#allocation8 + $0x370] sm:$0xff]
    %v576 = vld [vmem:[#allocation8 + $0x378] sm:$0xff]
    %v577 = vld [vmem:[#allocation8 + $0x380] sm:$0xff]
    %v578 = vld [vmem:[#allocation8 + $0x388] sm:$0xff]
    %v579 = vld [vmem:[#allocation8 + $0x390] sm:$0xff]
    %v580 = vld [vmem:[#allocation8 + $0x398] sm:$0xff]
    %v581 = vld [vmem:[#allocation8 + $0x3a0] sm:$0xff]
    %v582 = vld [vmem:[#allocation8 + $0x3a8] sm:$0xff]
    %v583 = vld [vmem:[#allocation8 + $0x3b0] sm:$0xff]
    %v584 = vld [vmem:[#allocation8 + $0x3b8] sm:$0xff]
    %v585 = vld [vmem:[#allocation8 + $0x3c0] sm:$0xff]
    %v586 = vld [vmem:[#allocation8 + $0x3c8] sm:$0xff]
    %v587 = vld [vmem:[#allocation8 + $0x3d0] sm:$0xff]
    %v588 = vld [vmem:[#allocation8 + $0x3d8] sm:$0xff]
    %v589 = vld [vmem:[#allocation8 + $0x3e0] sm:$0xff]
    %v590 = vld [vmem:[#allocation8 + $0x3e8] sm:$0xff]
    %v591 = vld [vmem:[#allocation8 + $0x3f0] sm:$0xff]
    %v592 = vld [vmem:[#allocation8 + $0x3f8] sm:$0xff]
    %v593 = vld [vmem:[#allocation8 + $0x400] sm:$0xff]
    %v594 = vld [vmem:[#allocation8 + $0x408] sm:$0xff]
    %v595 = vld [vmem:[#allocation8 + $0x410] sm:$0xff]
    %v596 = vld [vmem:[#allocation8 + $0x418] sm:$0xff]
    %v597 = vld [vmem:[#allocation8 + $0x420] sm:$0xff]
    %v598 = vld [vmem:[#allocation8 + $0x428] sm:$0xff]
    %v599 = vld [vmem:[#allocation8 + $0x430] sm:$0xff]
    %v600 = vld [vmem:[#allocation8 + $0x438] sm:$0xff]
    %v601 = vld [vmem:[#allocation8 + $0x440] sm:$0xff]
    %v602 = vld [vmem:[#allocation8 + $0x448] sm:$0xff]
    %v603 = vld [vmem:[#allocation8 + $0x450] sm:$0xff]
    %v604 = vld [vmem:[#allocation8 + $0x458] sm:$0xff]
    %v605 = vld [vmem:[#allocation8 + $0x460] sm:$0xff]
    %v606 = vld [vmem:[#allocation8 + $0x468] sm:$0xff]
    %v607 = vld [vmem:[#allocation8 + $0x470] sm:$0xff]
    %v608 = vld [vmem:[#allocation8 + $0x478] sm:$0xff]
    %v609 = vld [vmem:[#allocation8 + $0x480] sm:$0xff]
    %v610 = vld [vmem:[#allocation8 + $0x488] sm:$0xff]
    %v611 = vld [vmem:[#allocation8 + $0x490] sm:$0xff]
    %v612 = vld [vmem:[#allocation8 + $0x498] sm:$0xff]
    %v613 = vld [vmem:[#allocation8 + $0x4a0] sm:$0xff]
    %v614 = vld [vmem:[#allocation8 + $0x4a8] sm:$0xff]
    %v615 = vld [vmem:[#allocation8 + $0x4b0] sm:$0xff]
    %v616 = vld [vmem:[#allocation8 + $0x4b8] sm:$0xff]
    %v617 = vld [vmem:[#allocation8 + $0x4c0] sm:$0xff]
    %v618 = vld [vmem:[#allocation8 + $0x4c8] sm:$0xff]
    %v619 = vld [vmem:[#allocation8 + $0x4d0] sm:$0xff]
    %v620 = vld [vmem:[#allocation8 + $0x4d8] sm:$0xff]
    %v621 = vld [vmem:[#allocation8 + $0x4e0] sm:$0xff]
    %v622 = vld [vmem:[#allocation8 + $0x4e8] sm:$0xff]
    %v623 = vld [vmem:[#allocation8 + $0x4f0] sm:$0xff]
    %v624 = vld [vmem:[#allocation8 + $0x4f8] sm:$0xff]
    %v625 = vld [vmem:[#allocation8 + $0x500] sm:$0xff]
    %v626 = vld [vmem:[#allocation8 + $0x508] sm:$0xff]
    %v627 = vld [vmem:[#allocation8 + $0x510] sm:$0xff]
    %v628 = vld [vmem:[#allocation8 + $0x518] sm:$0xff]
    %v629 = vld [vmem:[#allocation8 + $0x520] sm:$0xff]
    %v630 = vld [vmem:[#allocation8 + $0x528] sm:$0xff]
    %v631 = vld [vmem:[#allocation8 + $0x530] sm:$0xff]
    %v632 = vld [vmem:[#allocation8 + $0x538] sm:$0xff]
    %v633 = vld [vmem:[#allocation8 + $0x540] sm:$0xff]
    %v634 = vld [vmem:[#allocation8 + $0x548] sm:$0xff]
    %v635 = vld [vmem:[#allocation8 + $0x550] sm:$0xff]
    %v636 = vld [vmem:[#allocation8 + $0x558] sm:$0xff]
    %v637 = vld [vmem:[#allocation8 + $0x560] sm:$0xff]
    %v638 = vld [vmem:[#allocation8 + $0x568] sm:$0xff]
    %v639 = vld [vmem:[#allocation8 + $0x570] sm:$0xff]
    %v640 = vld [vmem:[#allocation8 + $0x578] sm:$0xff]
    %v641 = vld [vmem:[#allocation8 + $0x580] sm:$0xff]
    %v642 = vld [vmem:[#allocation8 + $0x588] sm:$0xff]
    %v643 = vld [vmem:[#allocation8 + $0x590] sm:$0xff]
    %v644 = vld [vmem:[#allocation8 + $0x598] sm:$0xff]
    %v645 = vld [vmem:[#allocation8 + $0x5a0] sm:$0xff]
    %v646 = vld [vmem:[#allocation8 + $0x5a8] sm:$0xff]
    %v647 = vld [vmem:[#allocation8 + $0x5b0] sm:$0xff]
    %v648 = vld [vmem:[#allocation8 + $0x5b8] sm:$0xff]
    %v649 = vld [vmem:[#allocation8 + $0x5c0] sm:$0xff]
    %v650 = vld [vmem:[#allocation8 + $0x5c8] sm:$0xff]
    %v651 = vld [vmem:[#allocation8 + $0x5d0] sm:$0xff]
    %v652 = vld [vmem:[#allocation8 + $0x5d8] sm:$0xff]
    %v653 = vld [vmem:[#allocation8 + $0x5e0] sm:$0xff]
    %v654 = vld [vmem:[#allocation8 + $0x5e8] sm:$0xff]
    %v655 = vld [vmem:[#allocation8 + $0x5f0] sm:$0xff]
    %v656 = vld [vmem:[#allocation8 + $0x5f8] sm:$0xff]
    %v657 = vld [vmem:[#allocation8 + $0x600] sm:$0xff]
    %v658 = vld [vmem:[#allocation8 + $0x608] sm:$0xff]
    %v659 = vld [vmem:[#allocation8 + $0x610] sm:$0xff]
    %v660 = vld [vmem:[#allocation8 + $0x618] sm:$0xff]
    %v661 = vld [vmem:[#allocation8 + $0x620] sm:$0xff]
    %v662 = vld [vmem:[#allocation8 + $0x628] sm:$0xff]
    %v663 = vld [vmem:[#allocation8 + $0x630] sm:$0xff]
    %v664 = vld [vmem:[#allocation8 + $0x638] sm:$0xff]
    %v665 = vld [vmem:[#allocation8 + $0x640] sm:$0xff]
    %v666 = vld [vmem:[#allocation8 + $0x648] sm:$0xff]
    %v667 = vld [vmem:[#allocation8 + $0x650] sm:$0xff]
    %v668 = vld [vmem:[#allocation8 + $0x658] sm:$0xff]
    %v669 = vld [vmem:[#allocation8 + $0x660] sm:$0xff]
    %v670 = vld [vmem:[#allocation8 + $0x668] sm:$0xff]
    %v671 = vld [vmem:[#allocation8 + $0x670] sm:$0xff]
    %v672 = vld [vmem:[#allocation8 + $0x678] sm:$0xff]
    %v673 = vld [vmem:[#allocation8 + $0x680] sm:$0xff]
    %v674 = vld [vmem:[#allocation8 + $0x688] sm:$0xff]
    %v675 = vld [vmem:[#allocation8 + $0x690] sm:$0xff]
    %v676 = vld [vmem:[#allocation8 + $0x698] sm:$0xff]
    %v677 = vld [vmem:[#allocation8 + $0x6a0] sm:$0xff]
    %v678 = vld [vmem:[#allocation8 + $0x6a8] sm:$0xff]
    %v679 = vld [vmem:[#allocation8 + $0x6b0] sm:$0xff]
    %v680 = vld [vmem:[#allocation8 + $0x6b8] sm:$0xff]
    %v681 = vld [vmem:[#allocation8 + $0x6c0] sm:$0xff]
    %v682 = vld [vmem:[#allocation8 + $0x6c8] sm:$0xff]
    %v683 = vld [vmem:[#allocation8 + $0x6d0] sm:$0xff]
    %v684 = vld [vmem:[#allocation8 + $0x6d8] sm:$0xff]
    %v685 = vld [vmem:[#allocation8 + $0x6e0] sm:$0xff]
    %v686 = vld [vmem:[#allocation8 + $0x6e8] sm:$0xff]
    %v687 = vld [vmem:[#allocation8 + $0x6f0] sm:$0xff]
    %v688 = vld [vmem:[#allocation8 + $0x6f8] sm:$0xff]
    %v689 = vld [vmem:[#allocation8 + $0x700] sm:$0xff]
    %v690 = vld [vmem:[#allocation8 + $0x708] sm:$0xff]
    %v691 = vld [vmem:[#allocation8 + $0x710] sm:$0xff]
    %v692 = vld [vmem:[#allocation8 + $0x718] sm:$0xff]
    %v693 = vld [vmem:[#allocation8 + $0x720] sm:$0xff]
    %v694 = vld [vmem:[#allocation8 + $0x728] sm:$0xff]
    %v695 = vld [vmem:[#allocation8 + $0x730] sm:$0xff]
    %v696 = vld [vmem:[#allocation8 + $0x738] sm:$0xff]
    %v697 = vld [vmem:[#allocation8 + $0x740] sm:$0xff]
    %v698 = vld [vmem:[#allocation8 + $0x748] sm:$0xff]
    %v699 = vld [vmem:[#allocation8 + $0x750] sm:$0xff]
    %v700 = vld [vmem:[#allocation8 + $0x758] sm:$0xff]
    %v701 = vld [vmem:[#allocation8 + $0x760] sm:$0xff]
    %v702 = vld [vmem:[#allocation8 + $0x768] sm:$0xff]
    %v703 = vld [vmem:[#allocation8 + $0x770] sm:$0xff]
    %v704 = vld [vmem:[#allocation8 + $0x778] sm:$0xff]
    %v705 = vld [vmem:[#allocation8 + $0x780] sm:$0xff]
    %v706 = vld [vmem:[#allocation8 + $0x788] sm:$0xff]
    %v707 = vld [vmem:[#allocation8 + $0x790] sm:$0xff]
    %v708 = vld [vmem:[#allocation8 + $0x798] sm:$0xff]
    %v709 = vld [vmem:[#allocation8 + $0x7a0] sm:$0xff]
    %v710 = vld [vmem:[#allocation8 + $0x7a8] sm:$0xff]
    %v711 = vld [vmem:[#allocation8 + $0x7b0] sm:$0xff]
    %v712 = vld [vmem:[#allocation8 + $0x7b8] sm:$0xff]
    %v713 = vld [vmem:[#allocation8 + $0x7c0] sm:$0xff]
    %v714 = vld [vmem:[#allocation8 + $0x7c8] sm:$0xff]
    %v715 = vld [vmem:[#allocation8 + $0x7d0] sm:$0xff]
    %v716 = vld [vmem:[#allocation8 + $0x7d8] sm:$0xff]
    %v717 = vld [vmem:[#allocation8 + $0x7e0] sm:$0xff]
    %v718 = vld [vmem:[#allocation8 + $0x7e8] sm:$0xff]
    %v719 = vld [vmem:[#allocation8 + $0x7f0] sm:$0xff]
    %v720 = vld [vmem:[#allocation8 + $0x7f8] sm:$0xff]
    %v721 = vld [vmem:[%s4] sm:$0xf]
    %v723 = vlaneseq
    %v724 = vshrl.u32 %v723, 7
    %v725 = vsub.s32 0, %v724
    %v726 = vrot.slane %v721, %v725
    %v727 = vlaneseq
    %v728 = vshrl.u32 %v727, 7
    %v729 = vsub.s32 1, %v728
    %v730 = vrot.slane %v721, %v729
    %v731 = vlaneseq
    %v732 = vshrl.u32 %v731, 7
    %v733 = vsub.s32 2, %v732
    %v734 = vrot.slane %v721, %v733
    %v735 = vlaneseq
    %v736 = vshrl.u32 %v735, 7
    %v737 = vsub.s32 3, %v736
    %v738 = vrot.slane %v721, %v737
    %v999 = vunpack.c.l.b16 %v465
    %v1000 = vunpack.c.h.b16 %v465
    %v1001 = vunpack.c.l.b16 %v466
    %v1002 = vunpack.c.h.b16 %v466
    %v1003 = vunpack.c.l.b16 %v467
    %v1004 = vunpack.c.h.b16 %v467
    %v1005 = vunpack.c.l.b16 %v468
    %v1006 = vunpack.c.h.b16 %v468
    %v1007 = vunpack.c.l.b16 %v469
    %v1008 = vunpack.c.h.b16 %v469
    %v1009 = vunpack.c.l.b16 %v470
    %v1010 = vunpack.c.h.b16 %v470
    %v1011 = vunpack.c.l.b16 %v471
    %v1012 = vunpack.c.h.b16 %v471
    %v1013 = vunpack.c.l.b16 %v472
    %v1014 = vunpack.c.h.b16 %v472
    %v1015 = vunpack.c.l.b16 %v473
    %v1016 = vunpack.c.h.b16 %v473
    %v1017 = vunpack.c.l.b16 %v474
    %v1018 = vunpack.c.h.b16 %v474
    %v1019 = vunpack.c.l.b16 %v475
    %v1020 = vunpack.c.h.b16 %v475
    %v1021 = vunpack.c.l.b16 %v476
    %v1022 = vunpack.c.h.b16 %v476
    %v1023 = vunpack.c.l.b16 %v477
    %v1024 = vunpack.c.h.b16 %v477
    %v1025 = vunpack.c.l.b16 %v478
    %v1026 = vunpack.c.h.b16 %v478
    %v1027 = vunpack.c.l.b16 %v479
    %v1028 = vunpack.c.h.b16 %v479
    %v1029 = vunpack.c.l.b16 %v480
    %v1030 = vunpack.c.h.b16 %v480
    %v1031 = vunpack.c.l.b16 %v481
    %v1032 = vunpack.c.h.b16 %v481
    %v1033 = vunpack.c.l.b16 %v482
    %v1034 = vunpack.c.h.b16 %v482
    %v1035 = vunpack.c.l.b16 %v483
    %v1036 = vunpack.c.h.b16 %v483
    %v1037 = vunpack.c.l.b16 %v484
    %v1038 = vunpack.c.h.b16 %v484
    %v1039 = vunpack.c.l.b16 %v485
    %v1040 = vunpack.c.h.b16 %v485
    %v1041 = vunpack.c.l.b16 %v486
    %v1042 = vunpack.c.h.b16 %v486
    %v1043 = vunpack.c.l.b16 %v487
    %v1044 = vunpack.c.h.b16 %v487
    %v1045 = vunpack.c.l.b16 %v488
    %v1046 = vunpack.c.h.b16 %v488
    %v1047 = vunpack.c.l.b16 %v489
    %v1048 = vunpack.c.h.b16 %v489
    %v1049 = vunpack.c.l.b16 %v490
    %v1050 = vunpack.c.h.b16 %v490
    %v1051 = vunpack.c.l.b16 %v491
    %v1052 = vunpack.c.h.b16 %v491
    %v1053 = vunpack.c.l.b16 %v492
    %v1054 = vunpack.c.h.b16 %v492
    %v1055 = vunpack.c.l.b16 %v493
    %v1056 = vunpack.c.h.b16 %v493
    %v1057 = vunpack.c.l.b16 %v494
    %v1058 = vunpack.c.h.b16 %v494
    %v1059 = vunpack.c.l.b16 %v495
    %v1060 = vunpack.c.h.b16 %v495
    %v1061 = vunpack.c.l.b16 %v496
    %v1062 = vunpack.c.h.b16 %v496
    %v1063 = vunpack.c.l.b16 %v497
    %v1064 = vunpack.c.h.b16 %v497
    %v1065 = vunpack.c.l.b16 %v498
    %v1066 = vunpack.c.h.b16 %v498
    %v1067 = vunpack.c.l.b16 %v499
    %v1068 = vunpack.c.h.b16 %v499
    %v1069 = vunpack.c.l.b16 %v500
    %v1070 = vunpack.c.h.b16 %v500
    %v1071 = vunpack.c.l.b16 %v501
    %v1072 = vunpack.c.h.b16 %v501
    %v1073 = vunpack.c.l.b16 %v502
    %v1074 = vunpack.c.h.b16 %v502
    %v1075 = vunpack.c.l.b16 %v503
    %v1076 = vunpack.c.h.b16 %v503
    %v1077 = vunpack.c.l.b16 %v504
    %v1078 = vunpack.c.h.b16 %v504
    %v1079 = vunpack.c.l.b16 %v505
    %v1080 = vunpack.c.h.b16 %v505
    %v1081 = vunpack.c.l.b16 %v506
    %v1082 = vunpack.c.h.b16 %v506
    %v1083 = vunpack.c.l.b16 %v507
    %v1084 = vunpack.c.h.b16 %v507
    %v1085 = vunpack.c.l.b16 %v508
    %v1086 = vunpack.c.h.b16 %v508
    %v1087 = vunpack.c.l.b16 %v509
    %v1088 = vunpack.c.h.b16 %v509
    %v1089 = vunpack.c.l.b16 %v510
    %v1090 = vunpack.c.h.b16 %v510
    %v1091 = vunpack.c.l.b16 %v511
    %v1092 = vunpack.c.h.b16 %v511
    %v1093 = vunpack.c.l.b16 %v512
    %v1094 = vunpack.c.h.b16 %v512
    %v1095 = vunpack.c.l.b16 %v513
    %v1096 = vunpack.c.h.b16 %v513
    %v1097 = vunpack.c.l.b16 %v514
    %v1098 = vunpack.c.h.b16 %v514
    %v1099 = vunpack.c.l.b16 %v515
    %v1100 = vunpack.c.h.b16 %v515
    %v1101 = vunpack.c.l.b16 %v516
    %v1102 = vunpack.c.h.b16 %v516
    %v1103 = vunpack.c.l.b16 %v517
    %v1104 = vunpack.c.h.b16 %v517
    %v1105 = vunpack.c.l.b16 %v518
    %v1106 = vunpack.c.h.b16 %v518
    %v1107 = vunpack.c.l.b16 %v519
    %v1108 = vunpack.c.h.b16 %v519
    %v1109 = vunpack.c.l.b16 %v520
    %v1110 = vunpack.c.h.b16 %v520
    %v1111 = vunpack.c.l.b16 %v521
    %v1112 = vunpack.c.h.b16 %v521
    %v1113 = vunpack.c.l.b16 %v522
    %v1114 = vunpack.c.h.b16 %v522
    %v1115 = vunpack.c.l.b16 %v523
    %v1116 = vunpack.c.h.b16 %v523
    %v1117 = vunpack.c.l.b16 %v524
    %v1118 = vunpack.c.h.b16 %v524
    %v1119 = vunpack.c.l.b16 %v525
    %v1120 = vunpack.c.h.b16 %v525
    %v1121 = vunpack.c.l.b16 %v526
    %v1122 = vunpack.c.h.b16 %v526
    %v1123 = vunpack.c.l.b16 %v527
    %v1124 = vunpack.c.h.b16 %v527
    %v1125 = vunpack.c.l.b16 %v528
    %v1126 = vunpack.c.h.b16 %v528
    %v1127 = vunpack.c.l.b16 %v529
    %v1128 = vunpack.c.h.b16 %v529
    %v1129 = vunpack.c.l.b16 %v530
    %v1130 = vunpack.c.h.b16 %v530
    %v1131 = vunpack.c.l.b16 %v531
    %v1132 = vunpack.c.h.b16 %v531
    %v1133 = vunpack.c.l.b16 %v532
    %v1134 = vunpack.c.h.b16 %v532
    %v1135 = vunpack.c.l.b16 %v533
    %v1136 = vunpack.c.h.b16 %v533
    %v1137 = vunpack.c.l.b16 %v534
    %v1138 = vunpack.c.h.b16 %v534
    %v1139 = vunpack.c.l.b16 %v535
    %v1140 = vunpack.c.h.b16 %v535
    %v1141 = vunpack.c.l.b16 %v536
    %v1142 = vunpack.c.h.b16 %v536
    %v1143 = vunpack.c.l.b16 %v537
    %v1144 = vunpack.c.h.b16 %v537
    %v1145 = vunpack.c.l.b16 %v538
    %v1146 = vunpack.c.h.b16 %v538
    %v1147 = vunpack.c.l.b16 %v539
    %v1148 = vunpack.c.h.b16 %v539
    %v1149 = vunpack.c.l.b16 %v540
    %v1150 = vunpack.c.h.b16 %v540
    %v1151 = vunpack.c.l.b16 %v541
    %v1152 = vunpack.c.h.b16 %v541
    %v1153 = vunpack.c.l.b16 %v542
    %v1154 = vunpack.c.h.b16 %v542
    %v1155 = vunpack.c.l.b16 %v543
    %v1156 = vunpack.c.h.b16 %v543
    %v1157 = vunpack.c.l.b16 %v544
    %v1158 = vunpack.c.h.b16 %v544
    %v1159 = vunpack.c.l.b16 %v545
    %v1160 = vunpack.c.h.b16 %v545
    %v1161 = vunpack.c.l.b16 %v546
    %v1162 = vunpack.c.h.b16 %v546
    %v1163 = vunpack.c.l.b16 %v547
    %v1164 = vunpack.c.h.b16 %v547
    %v1165 = vunpack.c.l.b16 %v548
    %v1166 = vunpack.c.h.b16 %v548
    %v1167 = vunpack.c.l.b16 %v549
    %v1168 = vunpack.c.h.b16 %v549
    %v1169 = vunpack.c.l.b16 %v550
    %v1170 = vunpack.c.h.b16 %v550
    %v1171 = vunpack.c.l.b16 %v551
    %v1172 = vunpack.c.h.b16 %v551
    %v1173 = vunpack.c.l.b16 %v552
    %v1174 = vunpack.c.h.b16 %v552
    %v1175 = vunpack.c.l.b16 %v553
    %v1176 = vunpack.c.h.b16 %v553
    %v1177 = vunpack.c.l.b16 %v554
    %v1178 = vunpack.c.h.b16 %v554
    %v1179 = vunpack.c.l.b16 %v555
    %v1180 = vunpack.c.h.b16 %v555
    %v1181 = vunpack.c.l.b16 %v556
    %v1182 = vunpack.c.h.b16 %v556
    %v1183 = vunpack.c.l.b16 %v557
    %v1184 = vunpack.c.h.b16 %v557
    %v1185 = vunpack.c.l.b16 %v558
    %v1186 = vunpack.c.h.b16 %v558
    %v1187 = vunpack.c.l.b16 %v559
    %v1188 = vunpack.c.h.b16 %v559
    %v1189 = vunpack.c.l.b16 %v560
    %v1190 = vunpack.c.h.b16 %v560
    %v1191 = vunpack.c.l.b16 %v561
    %v1192 = vunpack.c.h.b16 %v561
    %v1193 = vunpack.c.l.b16 %v562
    %v1194 = vunpack.c.h.b16 %v562
    %v1195 = vunpack.c.l.b16 %v563
    %v1196 = vunpack.c.h.b16 %v563
    %v1197 = vunpack.c.l.b16 %v564
    %v1198 = vunpack.c.h.b16 %v564
    %v1199 = vunpack.c.l.b16 %v565
    %v1200 = vunpack.c.h.b16 %v565
    %v1201 = vunpack.c.l.b16 %v566
    %v1202 = vunpack.c.h.b16 %v566
    %v1203 = vunpack.c.l.b16 %v567
    %v1204 = vunpack.c.h.b16 %v567
    %v1205 = vunpack.c.l.b16 %v568
    %v1206 = vunpack.c.h.b16 %v568
    %v1207 = vunpack.c.l.b16 %v569
    %v1208 = vunpack.c.h.b16 %v569
    %v1209 = vunpack.c.l.b16 %v570
    %v1210 = vunpack.c.h.b16 %v570
    %v1211 = vunpack.c.l.b16 %v571
    %v1212 = vunpack.c.h.b16 %v571
    %v1213 = vunpack.c.l.b16 %v572
    %v1214 = vunpack.c.h.b16 %v572
    %v1215 = vunpack.c.l.b16 %v573
    %v1216 = vunpack.c.h.b16 %v573
    %v1217 = vunpack.c.l.b16 %v574
    %v1218 = vunpack.c.h.b16 %v574
    %v1219 = vunpack.c.l.b16 %v575
    %v1220 = vunpack.c.h.b16 %v575
    %v1221 = vunpack.c.l.b16 %v576
    %v1222 = vunpack.c.h.b16 %v576
    %v1223 = vunpack.c.l.b16 %v577
    %v1224 = vunpack.c.h.b16 %v577
    %v1225 = vunpack.c.l.b16 %v578
    %v1226 = vunpack.c.h.b16 %v578
    %v1227 = vunpack.c.l.b16 %v579
    %v1228 = vunpack.c.h.b16 %v579
    %v1229 = vunpack.c.l.b16 %v580
    %v1230 = vunpack.c.h.b16 %v580
    %v1231 = vunpack.c.l.b16 %v581
    %v1232 = vunpack.c.h.b16 %v581
    %v1233 = vunpack.c.l.b16 %v582
    %v1234 = vunpack.c.h.b16 %v582
    %v1235 = vunpack.c.l.b16 %v583
    %v1236 = vunpack.c.h.b16 %v583
    %v1237 = vunpack.c.l.b16 %v584
    %v1238 = vunpack.c.h.b16 %v584
    %v1239 = vunpack.c.l.b16 %v585
    %v1240 = vunpack.c.h.b16 %v585
    %v1241 = vunpack.c.l.b16 %v586
    %v1242 = vunpack.c.h.b16 %v586
    %v1243 = vunpack.c.l.b16 %v587
    %v1244 = vunpack.c.h.b16 %v587
    %v1245 = vunpack.c.l.b16 %v588
    %v1246 = vunpack.c.h.b16 %v588
    %v1247 = vunpack.c.l.b16 %v589
    %v1248 = vunpack.c.h.b16 %v589
    %v1249 = vunpack.c.l.b16 %v590
    %v1250 = vunpack.c.h.b16 %v590
    %v1251 = vunpack.c.l.b16 %v591
    %v1252 = vunpack.c.h.b16 %v591
    %v1253 = vunpack.c.l.b16 %v592
    %v1254 = vunpack.c.h.b16 %v592
    %v1255 = vunpack.c.l.b16 %v593
    %v1256 = vunpack.c.h.b16 %v593
    %v1257 = vunpack.c.l.b16 %v594
    %v1258 = vunpack.c.h.b16 %v594
    %v1259 = vunpack.c.l.b16 %v595
    %v1260 = vunpack.c.h.b16 %v595
    %v1261 = vunpack.c.l.b16 %v596
    %v1262 = vunpack.c.h.b16 %v596
    %v1263 = vunpack.c.l.b16 %v597
    %v1264 = vunpack.c.h.b16 %v597
    %v1265 = vunpack.c.l.b16 %v598
    %v1266 = vunpack.c.h.b16 %v598
    %v1267 = vunpack.c.l.b16 %v599
    %v1268 = vunpack.c.h.b16 %v599
    %v1269 = vunpack.c.l.b16 %v600
    %v1270 = vunpack.c.h.b16 %v600
    %v1271 = vunpack.c.l.b16 %v601
    %v1272 = vunpack.c.h.b16 %v601
    %v1273 = vunpack.c.l.b16 %v602
    %v1274 = vunpack.c.h.b16 %v602
    %v1275 = vunpack.c.l.b16 %v603
    %v1276 = vunpack.c.h.b16 %v603
    %v1277 = vunpack.c.l.b16 %v604
    %v1278 = vunpack.c.h.b16 %v604
    %v1279 = vunpack.c.l.b16 %v605
    %v1280 = vunpack.c.h.b16 %v605
    %v1281 = vunpack.c.l.b16 %v606
    %v1282 = vunpack.c.h.b16 %v606
    %v1283 = vunpack.c.l.b16 %v607
    %v1284 = vunpack.c.h.b16 %v607
    %v1285 = vunpack.c.l.b16 %v608
    %v1286 = vunpack.c.h.b16 %v608
    %v1287 = vunpack.c.l.b16 %v609
    %v1288 = vunpack.c.h.b16 %v609
    %v1289 = vunpack.c.l.b16 %v610
    %v1290 = vunpack.c.h.b16 %v610
    %v1291 = vunpack.c.l.b16 %v611
    %v1292 = vunpack.c.h.b16 %v611
    %v1293 = vunpack.c.l.b16 %v612
    %v1294 = vunpack.c.h.b16 %v612
    %v1295 = vunpack.c.l.b16 %v613
    %v1296 = vunpack.c.h.b16 %v613
    %v1297 = vunpack.c.l.b16 %v614
    %v1298 = vunpack.c.h.b16 %v614
    %v1299 = vunpack.c.l.b16 %v615
    %v1300 = vunpack.c.h.b16 %v615
    %v1301 = vunpack.c.l.b16 %v616
    %v1302 = vunpack.c.h.b16 %v616
    %v1303 = vunpack.c.l.b16 %v617
    %v1304 = vunpack.c.h.b16 %v617
    %v1305 = vunpack.c.l.b16 %v618
    %v1306 = vunpack.c.h.b16 %v618
    %v1307 = vunpack.c.l.b16 %v619
    %v1308 = vunpack.c.h.b16 %v619
    %v1309 = vunpack.c.l.b16 %v620
    %v1310 = vunpack.c.h.b16 %v620
    %v1311 = vunpack.c.l.b16 %v621
    %v1312 = vunpack.c.h.b16 %v621
    %v1313 = vunpack.c.l.b16 %v622
    %v1314 = vunpack.c.h.b16 %v622
    %v1315 = vunpack.c.l.b16 %v623
    %v1316 = vunpack.c.h.b16 %v623
    %v1317 = vunpack.c.l.b16 %v624
    %v1318 = vunpack.c.h.b16 %v624
    %v1319 = vunpack.c.l.b16 %v625
    %v1320 = vunpack.c.h.b16 %v625
    %v1321 = vunpack.c.l.b16 %v626
    %v1322 = vunpack.c.h.b16 %v626
    %v1323 = vunpack.c.l.b16 %v627
    %v1324 = vunpack.c.h.b16 %v627
    %v1325 = vunpack.c.l.b16 %v628
    %v1326 = vunpack.c.h.b16 %v628
    %v1327 = vunpack.c.l.b16 %v629
    %v1328 = vunpack.c.h.b16 %v629
    %v1329 = vunpack.c.l.b16 %v630
    %v1330 = vunpack.c.h.b16 %v630
    %v1331 = vunpack.c.l.b16 %v631
    %v1332 = vunpack.c.h.b16 %v631
    %v1333 = vunpack.c.l.b16 %v632
    %v1334 = vunpack.c.h.b16 %v632
    %v1335 = vunpack.c.l.b16 %v633
    %v1336 = vunpack.c.h.b16 %v633
    %v1337 = vunpack.c.l.b16 %v634
    %v1338 = vunpack.c.h.b16 %v634
    %v1339 = vunpack.c.l.b16 %v635
    %v1340 = vunpack.c.h.b16 %v635
    %v1341 = vunpack.c.l.b16 %v636
    %v1342 = vunpack.c.h.b16 %v636
    %v1343 = vunpack.c.l.b16 %v637
    %v1344 = vunpack.c.h.b16 %v637
    %v1345 = vunpack.c.l.b16 %v638
    %v1346 = vunpack.c.h.b16 %v638
    %v1347 = vunpack.c.l.b16 %v639
    %v1348 = vunpack.c.h.b16 %v639
    %v1349 = vunpack.c.l.b16 %v640
    %v1350 = vunpack.c.h.b16 %v640
    %v1351 = vunpack.c.l.b16 %v641
    %v1352 = vunpack.c.h.b16 %v641
    %v1353 = vunpack.c.l.b16 %v642
    %v1354 = vunpack.c.h.b16 %v642
    %v1355 = vunpack.c.l.b16 %v643
    %v1356 = vunpack.c.h.b16 %v643
    %v1357 = vunpack.c.l.b16 %v644
    %v1358 = vunpack.c.h.b16 %v644
    %v1359 = vunpack.c.l.b16 %v645
    %v1360 = vunpack.c.h.b16 %v645
    %v1361 = vunpack.c.l.b16 %v646
    %v1362 = vunpack.c.h.b16 %v646
    %v1363 = vunpack.c.l.b16 %v647
    %v1364 = vunpack.c.h.b16 %v647
    %v1365 = vunpack.c.l.b16 %v648
    %v1366 = vunpack.c.h.b16 %v648
    %v1367 = vunpack.c.l.b16 %v649
    %v1368 = vunpack.c.h.b16 %v649
    %v1369 = vunpack.c.l.b16 %v650
    %v1370 = vunpack.c.h.b16 %v650
    %v1371 = vunpack.c.l.b16 %v651
    %v1372 = vunpack.c.h.b16 %v651
    %v1373 = vunpack.c.l.b16 %v652
    %v1374 = vunpack.c.h.b16 %v652
    %v1375 = vunpack.c.l.b16 %v653
    %v1376 = vunpack.c.h.b16 %v653
    %v1377 = vunpack.c.l.b16 %v654
    %v1378 = vunpack.c.h.b16 %v654
    %v1379 = vunpack.c.l.b16 %v655
    %v1380 = vunpack.c.h.b16 %v655
    %v1381 = vunpack.c.l.b16 %v656
    %v1382 = vunpack.c.h.b16 %v656
    %v1383 = vunpack.c.l.b16 %v657
    %v1384 = vunpack.c.h.b16 %v657
    %v1385 = vunpack.c.l.b16 %v658
    %v1386 = vunpack.c.h.b16 %v658
    %v1387 = vunpack.c.l.b16 %v659
    %v1388 = vunpack.c.h.b16 %v659
    %v1389 = vunpack.c.l.b16 %v660
    %v1390 = vunpack.c.h.b16 %v660
    %v1391 = vunpack.c.l.b16 %v661
    %v1392 = vunpack.c.h.b16 %v661
    %v1393 = vunpack.c.l.b16 %v662
    %v1394 = vunpack.c.h.b16 %v662
    %v1395 = vunpack.c.l.b16 %v663
    %v1396 = vunpack.c.h.b16 %v663
    %v1397 = vunpack.c.l.b16 %v664
    %v1398 = vunpack.c.h.b16 %v664
    %v1399 = vunpack.c.l.b16 %v665
    %v1400 = vunpack.c.h.b16 %v665
    %v1401 = vunpack.c.l.b16 %v666
    %v1402 = vunpack.c.h.b16 %v666
    %v1403 = vunpack.c.l.b16 %v667
    %v1404 = vunpack.c.h.b16 %v667
    %v1405 = vunpack.c.l.b16 %v668
    %v1406 = vunpack.c.h.b16 %v668
    %v1407 = vunpack.c.l.b16 %v669
    %v1408 = vunpack.c.h.b16 %v669
    %v1409 = vunpack.c.l.b16 %v670
    %v1410 = vunpack.c.h.b16 %v670
    %v1411 = vunpack.c.l.b16 %v671
    %v1412 = vunpack.c.h.b16 %v671
    %v1413 = vunpack.c.l.b16 %v672
    %v1414 = vunpack.c.h.b16 %v672
    %v1415 = vunpack.c.l.b16 %v673
    %v1416 = vunpack.c.h.b16 %v673
    %v1417 = vunpack.c.l.b16 %v674
    %v1418 = vunpack.c.h.b16 %v674
    %v1419 = vunpack.c.l.b16 %v675
    %v1420 = vunpack.c.h.b16 %v675
    %v1421 = vunpack.c.l.b16 %v676
    %v1422 = vunpack.c.h.b16 %v676
    %v1423 = vunpack.c.l.b16 %v677
    %v1424 = vunpack.c.h.b16 %v677
    %v1425 = vunpack.c.l.b16 %v678
    %v1426 = vunpack.c.h.b16 %v678
    %v1427 = vunpack.c.l.b16 %v679
    %v1428 = vunpack.c.h.b16 %v679
    %v1429 = vunpack.c.l.b16 %v680
    %v1430 = vunpack.c.h.b16 %v680
    %v1431 = vunpack.c.l.b16 %v681
    %v1432 = vunpack.c.h.b16 %v681
    %v1433 = vunpack.c.l.b16 %v682
    %v1434 = vunpack.c.h.b16 %v682
    %v1435 = vunpack.c.l.b16 %v683
    %v1436 = vunpack.c.h.b16 %v683
    %v1437 = vunpack.c.l.b16 %v684
    %v1438 = vunpack.c.h.b16 %v684
    %v1439 = vunpack.c.l.b16 %v685
    %v1440 = vunpack.c.h.b16 %v685
    %v1441 = vunpack.c.l.b16 %v686
    %v1442 = vunpack.c.h.b16 %v686
    %v1443 = vunpack.c.l.b16 %v687
    %v1444 = vunpack.c.h.b16 %v687
    %v1445 = vunpack.c.l.b16 %v688
    %v1446 = vunpack.c.h.b16 %v688
    %v1447 = vunpack.c.l.b16 %v689
    %v1448 = vunpack.c.h.b16 %v689
    %v1449 = vunpack.c.l.b16 %v690
    %v1450 = vunpack.c.h.b16 %v690
    %v1451 = vunpack.c.l.b16 %v691
    %v1452 = vunpack.c.h.b16 %v691
    %v1453 = vunpack.c.l.b16 %v692
    %v1454 = vunpack.c.h.b16 %v692
    %v1455 = vunpack.c.l.b16 %v693
    %v1456 = vunpack.c.h.b16 %v693
    %v1457 = vunpack.c.l.b16 %v694
    %v1458 = vunpack.c.h.b16 %v694
    %v1459 = vunpack.c.l.b16 %v695
    %v1460 = vunpack.c.h.b16 %v695
    %v1461 = vunpack.c.l.b16 %v696
    %v1462 = vunpack.c.h.b16 %v696
    %v1463 = vunpack.c.l.b16 %v697
    %v1464 = vunpack.c.h.b16 %v697
    %v1465 = vunpack.c.l.b16 %v698
    %v1466 = vunpack.c.h.b16 %v698
    %v1467 = vunpack.c.l.b16 %v699
    %v1468 = vunpack.c.h.b16 %v699
    %v1469 = vunpack.c.l.b16 %v700
    %v1470 = vunpack.c.h.b16 %v700
    %v1471 = vunpack.c.l.b16 %v701
    %v1472 = vunpack.c.h.b16 %v701
    %v1473 = vunpack.c.l.b16 %v702
    %v1474 = vunpack.c.h.b16 %v702
    %v1475 = vunpack.c.l.b16 %v703
    %v1476 = vunpack.c.h.b16 %v703
    %v1477 = vunpack.c.l.b16 %v704
    %v1478 = vunpack.c.h.b16 %v704
    %v1479 = vunpack.c.l.b16 %v705
    %v1480 = vunpack.c.h.b16 %v705
    %v1481 = vunpack.c.l.b16 %v706
    %v1482 = vunpack.c.h.b16 %v706
    %v1483 = vunpack.c.l.b16 %v707
    %v1484 = vunpack.c.h.b16 %v707
    %v1485 = vunpack.c.l.b16 %v708
    %v1486 = vunpack.c.h.b16 %v708
    %v1487 = vunpack.c.l.b16 %v709
    %v1488 = vunpack.c.h.b16 %v709
    %v1489 = vunpack.c.l.b16 %v710
    %v1490 = vunpack.c.h.b16 %v710
    %v1491 = vunpack.c.l.b16 %v711
    %v1492 = vunpack.c.h.b16 %v711
    %v1493 = vunpack.c.l.b16 %v712
    %v1494 = vunpack.c.h.b16 %v712
    %v1495 = vunpack.c.l.b16 %v713
    %v1496 = vunpack.c.h.b16 %v713
    %v1497 = vunpack.c.l.b16 %v714
    %v1498 = vunpack.c.h.b16 %v714
    %v1499 = vunpack.c.l.b16 %v715
    %v1500 = vunpack.c.h.b16 %v715
    %v1501 = vunpack.c.l.b16 %v716
    %v1502 = vunpack.c.h.b16 %v716
    %v1503 = vunpack.c.l.b16 %v717
    %v1504 = vunpack.c.h.b16 %v717
    %v1505 = vunpack.c.l.b16 %v718
    %v1506 = vunpack.c.h.b16 %v718
    %v1507 = vunpack.c.l.b16 %v719
    %v1508 = vunpack.c.h.b16 %v719
    %v1509 = vunpack.c.l.b16 %v720
    %v1510 = vunpack.c.h.b16 %v720
    %v1511 = vpack.c.b16 %v1003, %v999
    %v1512 = vpack.c.b16 %v1004, %v1000
    %v1513 = vpack.c.b16 %v1005, %v1001
    %v1514 = vpack.c.b16 %v1006, %v1002
    %v1515 = vpack.c.b16 %v1011, %v1007
    %v1516 = vpack.c.b16 %v1012, %v1008
    %v1517 = vpack.c.b16 %v1013, %v1009
    %v1518 = vpack.c.b16 %v1014, %v1010
    %v1519 = vpack.c.b16 %v1019, %v1015
    %v1520 = vpack.c.b16 %v1020, %v1016
    %v1521 = vpack.c.b16 %v1021, %v1017
    %v1522 = vpack.c.b16 %v1022, %v1018
    %v1523 = vpack.c.b16 %v1027, %v1023
    %v1524 = vpack.c.b16 %v1028, %v1024
    %v1525 = vpack.c.b16 %v1029, %v1025
    %v1526 = vpack.c.b16 %v1030, %v1026
    %v1527 = vpack.c.b16 %v1035, %v1031
    %v1528 = vpack.c.b16 %v1036, %v1032
    %v1529 = vpack.c.b16 %v1037, %v1033
    %v1530 = vpack.c.b16 %v1038, %v1034
    %v1531 = vpack.c.b16 %v1043, %v1039
    %v1532 = vpack.c.b16 %v1044, %v1040
    %v1533 = vpack.c.b16 %v1045, %v1041
    %v1534 = vpack.c.b16 %v1046, %v1042
    %v1535 = vpack.c.b16 %v1051, %v1047
    %v1536 = vpack.c.b16 %v1052, %v1048
    %v1537 = vpack.c.b16 %v1053, %v1049
    %v1538 = vpack.c.b16 %v1054, %v1050
    %v1539 = vpack.c.b16 %v1059, %v1055
    %v1540 = vpack.c.b16 %v1060, %v1056
    %v1541 = vpack.c.b16 %v1061, %v1057
    %v1542 = vpack.c.b16 %v1062, %v1058
    %v1543 = vpack.c.b16 %v1067, %v1063
    %v1544 = vpack.c.b16 %v1068, %v1064
    %v1545 = vpack.c.b16 %v1069, %v1065
    %v1546 = vpack.c.b16 %v1070, %v1066
    %v1547 = vpack.c.b16 %v1075, %v1071
    %v1548 = vpack.c.b16 %v1076, %v1072
    %v1549 = vpack.c.b16 %v1077, %v1073
    %v1550 = vpack.c.b16 %v1078, %v1074
    %v1551 = vpack.c.b16 %v1083, %v1079
    %v1552 = vpack.c.b16 %v1084, %v1080
    %v1553 = vpack.c.b16 %v1085, %v1081
    %v1554 = vpack.c.b16 %v1086, %v1082
    %v1555 = vpack.c.b16 %v1091, %v1087
    %v1556 = vpack.c.b16 %v1092, %v1088
    %v1557 = vpack.c.b16 %v1093, %v1089
    %v1558 = vpack.c.b16 %v1094, %v1090
    %v1559 = vpack.c.b16 %v1099, %v1095
    %v1560 = vpack.c.b16 %v1100, %v1096
    %v1561 = vpack.c.b16 %v1101, %v1097
    %v1562 = vpack.c.b16 %v1102, %v1098
    %v1563 = vpack.c.b16 %v1107, %v1103
    %v1564 = vpack.c.b16 %v1108, %v1104
    %v1565 = vpack.c.b16 %v1109, %v1105
    %v1566 = vpack.c.b16 %v1110, %v1106
    %v1567 = vpack.c.b16 %v1115, %v1111
    %v1568 = vpack.c.b16 %v1116, %v1112
    %v1569 = vpack.c.b16 %v1117, %v1113
    %v1570 = vpack.c.b16 %v1118, %v1114
    %v1571 = vpack.c.b16 %v1123, %v1119
    %v1572 = vpack.c.b16 %v1124, %v1120
    %v1573 = vpack.c.b16 %v1125, %v1121
    %v1574 = vpack.c.b16 %v1126, %v1122
    %v1575 = vpack.c.b16 %v1131, %v1127
    %v1576 = vpack.c.b16 %v1132, %v1128
    %v1577 = vpack.c.b16 %v1133, %v1129
    %v1578 = vpack.c.b16 %v1134, %v1130
    %v1579 = vpack.c.b16 %v1139, %v1135
    %v1580 = vpack.c.b16 %v1140, %v1136
    %v1581 = vpack.c.b16 %v1141, %v1137
    %v1582 = vpack.c.b16 %v1142, %v1138
    %v1583 = vpack.c.b16 %v1147, %v1143
    %v1584 = vpack.c.b16 %v1148, %v1144
    %v1585 = vpack.c.b16 %v1149, %v1145
    %v1586 = vpack.c.b16 %v1150, %v1146
    %v1587 = vpack.c.b16 %v1155, %v1151
    %v1588 = vpack.c.b16 %v1156, %v1152
    %v1589 = vpack.c.b16 %v1157, %v1153
    %v1590 = vpack.c.b16 %v1158, %v1154
    %v1591 = vpack.c.b16 %v1163, %v1159
    %v1592 = vpack.c.b16 %v1164, %v1160
    %v1593 = vpack.c.b16 %v1165, %v1161
    %v1594 = vpack.c.b16 %v1166, %v1162
    %v1595 = vpack.c.b16 %v1171, %v1167
    %v1596 = vpack.c.b16 %v1172, %v1168
    %v1597 = vpack.c.b16 %v1173, %v1169
    %v1598 = vpack.c.b16 %v1174, %v1170
    %v1599 = vpack.c.b16 %v1179, %v1175
    %v1600 = vpack.c.b16 %v1180, %v1176
    %v1601 = vpack.c.b16 %v1181, %v1177
    %v1602 = vpack.c.b16 %v1182, %v1178
    %v1603 = vpack.c.b16 %v1187, %v1183
    %v1604 = vpack.c.b16 %v1188, %v1184
    %v1605 = vpack.c.b16 %v1189, %v1185
    %v1606 = vpack.c.b16 %v1190, %v1186
    %v1607 = vpack.c.b16 %v1195, %v1191
    %v1608 = vpack.c.b16 %v1196, %v1192
    %v1609 = vpack.c.b16 %v1197, %v1193
    %v1610 = vpack.c.b16 %v1198, %v1194
    %v1611 = vpack.c.b16 %v1203, %v1199
    %v1612 = vpack.c.b16 %v1204, %v1200
    %v1613 = vpack.c.b16 %v1205, %v1201
    %v1614 = vpack.c.b16 %v1206, %v1202
    %v1615 = vpack.c.b16 %v1211, %v1207
    %v1616 = vpack.c.b16 %v1212, %v1208
    %v1617 = vpack.c.b16 %v1213, %v1209
    %v1618 = vpack.c.b16 %v1214, %v1210
    %v1619 = vpack.c.b16 %v1219, %v1215
    %v1620 = vpack.c.b16 %v1220, %v1216
    %v1621 = vpack.c.b16 %v1221, %v1217
    %v1622 = vpack.c.b16 %v1222, %v1218
    %v1623 = vpack.c.b16 %v1227, %v1223
    %v1624 = vpack.c.b16 %v1228, %v1224
    %v1625 = vpack.c.b16 %v1229, %v1225
    %v1626 = vpack.c.b16 %v1230, %v1226
    %v1627 = vpack.c.b16 %v1235, %v1231
    %v1628 = vpack.c.b16 %v1236, %v1232
    %v1629 = vpack.c.b16 %v1237, %v1233
    %v1630 = vpack.c.b16 %v1238, %v1234
    %v1631 = vpack.c.b16 %v1243, %v1239
    %v1632 = vpack.c.b16 %v1244, %v1240
    %v1633 = vpack.c.b16 %v1245, %v1241
    %v1634 = vpack.c.b16 %v1246, %v1242
    %v1635 = vpack.c.b16 %v1251, %v1247
    %v1636 = vpack.c.b16 %v1252, %v1248
    %v1637 = vpack.c.b16 %v1253, %v1249
    %v1638 = vpack.c.b16 %v1254, %v1250
    %v1639 = vpack.c.b16 %v1259, %v1255
    %v1640 = vpack.c.b16 %v1260, %v1256
    %v1641 = vpack.c.b16 %v1261, %v1257
    %v1642 = vpack.c.b16 %v1262, %v1258
    %v1643 = vpack.c.b16 %v1267, %v1263
    %v1644 = vpack.c.b16 %v1268, %v1264
    %v1645 = vpack.c.b16 %v1269, %v1265
    %v1646 = vpack.c.b16 %v1270, %v1266
    %v1647 = vpack.c.b16 %v1275, %v1271
    %v1648 = vpack.c.b16 %v1276, %v1272
    %v1649 = vpack.c.b16 %v1277, %v1273
    %v1650 = vpack.c.b16 %v1278, %v1274
    %v1651 = vpack.c.b16 %v1283, %v1279
    %v1652 = vpack.c.b16 %v1284, %v1280
    %v1653 = vpack.c.b16 %v1285, %v1281
    %v1654 = vpack.c.b16 %v1286, %v1282
    %v1655 = vpack.c.b16 %v1291, %v1287
    %v1656 = vpack.c.b16 %v1292, %v1288
    %v1657 = vpack.c.b16 %v1293, %v1289
    %v1658 = vpack.c.b16 %v1294, %v1290
    %v1659 = vpack.c.b16 %v1299, %v1295
    %v1660 = vpack.c.b16 %v1300, %v1296
    %v1661 = vpack.c.b16 %v1301, %v1297
    %v1662 = vpack.c.b16 %v1302, %v1298
    %v1663 = vpack.c.b16 %v1307, %v1303
    %v1664 = vpack.c.b16 %v1308, %v1304
    %v1665 = vpack.c.b16 %v1309, %v1305
    %v1666 = vpack.c.b16 %v1310, %v1306
    %v1667 = vpack.c.b16 %v1315, %v1311
    %v1668 = vpack.c.b16 %v1316, %v1312
    %v1669 = vpack.c.b16 %v1317, %v1313
    %v1670 = vpack.c.b16 %v1318, %v1314
    %v1671 = vpack.c.b16 %v1323, %v1319
    %v1672 = vpack.c.b16 %v1324, %v1320
    %v1673 = vpack.c.b16 %v1325, %v1321
    %v1674 = vpack.c.b16 %v1326, %v1322
    %v1675 = vpack.c.b16 %v1331, %v1327
    %v1676 = vpack.c.b16 %v1332, %v1328
    %v1677 = vpack.c.b16 %v1333, %v1329
    %v1678 = vpack.c.b16 %v1334, %v1330
    %v1679 = vpack.c.b16 %v1339, %v1335
    %v1680 = vpack.c.b16 %v1340, %v1336
    %v1681 = vpack.c.b16 %v1341, %v1337
    %v1682 = vpack.c.b16 %v1342, %v1338
    %v1683 = vpack.c.b16 %v1347, %v1343
    %v1684 = vpack.c.b16 %v1348, %v1344
    %v1685 = vpack.c.b16 %v1349, %v1345
    %v1686 = vpack.c.b16 %v1350, %v1346
    %v1687 = vpack.c.b16 %v1355, %v1351
    %v1688 = vpack.c.b16 %v1356, %v1352
    %v1689 = vpack.c.b16 %v1357, %v1353
    %v1690 = vpack.c.b16 %v1358, %v1354
    %v1691 = vpack.c.b16 %v1363, %v1359
    %v1692 = vpack.c.b16 %v1364, %v1360
    %v1693 = vpack.c.b16 %v1365, %v1361
    %v1694 = vpack.c.b16 %v1366, %v1362
    %v1695 = vpack.c.b16 %v1371, %v1367
    %v1696 = vpack.c.b16 %v1372, %v1368
    %v1697 = vpack.c.b16 %v1373, %v1369
    %v1698 = vpack.c.b16 %v1374, %v1370
    %v1699 = vpack.c.b16 %v1379, %v1375
    %v1700 = vpack.c.b16 %v1380, %v1376
    %v1701 = vpack.c.b16 %v1381, %v1377
    %v1702 = vpack.c.b16 %v1382, %v1378
    %v1703 = vpack.c.b16 %v1387, %v1383
    %v1704 = vpack.c.b16 %v1388, %v1384
    %v1705 = vpack.c.b16 %v1389, %v1385
    %v1706 = vpack.c.b16 %v1390, %v1386
    %v1707 = vpack.c.b16 %v1395, %v1391
    %v1708 = vpack.c.b16 %v1396, %v1392
    %v1709 = vpack.c.b16 %v1397, %v1393
    %v1710 = vpack.c.b16 %v1398, %v1394
    %v1711 = vpack.c.b16 %v1403, %v1399
    %v1712 = vpack.c.b16 %v1404, %v1400
    %v1713 = vpack.c.b16 %v1405, %v1401
    %v1714 = vpack.c.b16 %v1406, %v1402
    %v1715 = vpack.c.b16 %v1411, %v1407
    %v1716 = vpack.c.b16 %v1412, %v1408
    %v1717 = vpack.c.b16 %v1413, %v1409
    %v1718 = vpack.c.b16 %v1414, %v1410
    %v1719 = vpack.c.b16 %v1419, %v1415
    %v1720 = vpack.c.b16 %v1420, %v1416
    %v1721 = vpack.c.b16 %v1421, %v1417
    %v1722 = vpack.c.b16 %v1422, %v1418
    %v1723 = vpack.c.b16 %v1427, %v1423
    %v1724 = vpack.c.b16 %v1428, %v1424
    %v1725 = vpack.c.b16 %v1429, %v1425
    %v1726 = vpack.c.b16 %v1430, %v1426
    %v1727 = vpack.c.b16 %v1435, %v1431
    %v1728 = vpack.c.b16 %v1436, %v1432
    %v1729 = vpack.c.b16 %v1437, %v1433
    %v1730 = vpack.c.b16 %v1438, %v1434
    %v1731 = vpack.c.b16 %v1443, %v1439
    %v1732 = vpack.c.b16 %v1444, %v1440
    %v1733 = vpack.c.b16 %v1445, %v1441
    %v1734 = vpack.c.b16 %v1446, %v1442
    %v1735 = vpack.c.b16 %v1451, %v1447
    %v1736 = vpack.c.b16 %v1452, %v1448
    %v1737 = vpack.c.b16 %v1453, %v1449
    %v1738 = vpack.c.b16 %v1454, %v1450
    %v1739 = vpack.c.b16 %v1459, %v1455
    %v1740 = vpack.c.b16 %v1460, %v1456
    %v1741 = vpack.c.b16 %v1461, %v1457
    %v1742 = vpack.c.b16 %v1462, %v1458
    %v1743 = vpack.c.b16 %v1467, %v1463
    %v1744 = vpack.c.b16 %v1468, %v1464
    %v1745 = vpack.c.b16 %v1469, %v1465
    %v1746 = vpack.c.b16 %v1470, %v1466
    %v1747 = vpack.c.b16 %v1475, %v1471
    %v1748 = vpack.c.b16 %v1476, %v1472
    %v1749 = vpack.c.b16 %v1477, %v1473
    %v1750 = vpack.c.b16 %v1478, %v1474
    %v1751 = vpack.c.b16 %v1483, %v1479
    %v1752 = vpack.c.b16 %v1484, %v1480
    %v1753 = vpack.c.b16 %v1485, %v1481
    %v1754 = vpack.c.b16 %v1486, %v1482
    %v1755 = vpack.c.b16 %v1491, %v1487
    %v1756 = vpack.c.b16 %v1492, %v1488
    %v1757 = vpack.c.b16 %v1493, %v1489
    %v1758 = vpack.c.b16 %v1494, %v1490
    %v1759 = vpack.c.b16 %v1499, %v1495
    %v1760 = vpack.c.b16 %v1500, %v1496
    %v1761 = vpack.c.b16 %v1501, %v1497
    %v1762 = vpack.c.b16 %v1502, %v1498
    %v1763 = vpack.c.b16 %v1507, %v1503
    %v1764 = vpack.c.b16 %v1508, %v1504
    %v1765 = vpack.c.b16 %v1509, %v1505
    %v1766 = vpack.c.b16 %v1510, %v1506
    %2023 = vmatprep.subr.bf16.mxu0 %v1512
    %2024 = vmatpush1.bf16.msra.mxu0 %v1511
    %2025 = vmatprep.subr.bf16.mxu0 %v1516
    %2026 = vmatpush1.bf16.msra.mxu0 %v1515
    %2027 = vmatprep.subr.bf16.mxu0 %v1520
    %2028 = vmatpush1.bf16.msra.mxu0 %v1519
    %2029 = vmatprep.subr.bf16.mxu0 %v1524
    %2030 = vmatpush1.bf16.msra.mxu0 %v1523
    %2031 = vmatprep.subr.bf16.mxu0 %v1528
    %2032 = vmatpush1.bf16.msra.mxu0 %v1527
    %2033 = vmatprep.subr.bf16.mxu0 %v1532
    %2034 = vmatpush1.bf16.msra.mxu0 %v1531
    %2035 = vmatprep.subr.bf16.mxu0 %v1536
    %2036 = vmatpush1.bf16.msra.mxu0 %v1535
    %2037 = vmatprep.subr.bf16.mxu0 %v1540
    %2038 = vmatpush1.bf16.msra.mxu0 %v1539
    %2039 = vmatprep.subr.bf16.mxu0 %v1544
    %2040 = vmatpush1.bf16.msra.mxu0 %v1543
    %2041 = vmatprep.subr.bf16.mxu0 %v1548
    %2042 = vmatpush1.bf16.msra.mxu0 %v1547
    %2043 = vmatprep.subr.bf16.mxu0 %v1552
    %2044 = vmatpush1.bf16.msra.mxu0 %v1551
    %2045 = vmatprep.subr.bf16.mxu0 %v1556
    %2046 = vmatpush1.bf16.msra.mxu0 %v1555
    %2047 = vmatprep.subr.bf16.mxu0 %v1560
    %2048 = vmatpush1.bf16.msra.mxu0 %v1559
    %2049 = vmatprep.subr.bf16.mxu0 %v1564
    %2050 = vmatpush1.bf16.msra.mxu0 %v1563
    %2051 = vmatprep.subr.bf16.mxu0 %v1568
    %2052 = vmatpush1.bf16.msra.mxu0 %v1567
    %2053 = vmatprep.subr.bf16.mxu0 %v1572
    %2054 = vmatpush1.bf16.msra.mxu0 %v1571
    %2055 = vmatprep.mubr.bf16.mxu0 %v458
    %2056 = vmatmul.mubr.bf16.gmra.mrb[0].mxu0 %v457
    %v2057 = vpop.f32.mrb[0].mxu0
    %v2058 = vadd.f32 %v726, %v2057
    %v2059 = vpop.f32.mrb[0].mxu0
    %v2060 = vadd.f32 %v730, %v2059
    %v2061 = vpop.f32.mrb[0].mxu0
    %v2062 = vpop.f32.mrb[0].mxu0
    %2063 = vdwg.mxu0
    %2064 = vmatprep.subr.bf16.mxu0 %v1576
    %2065 = vmatpush1.bf16.msra.mxu0 %v1575
    %2066 = vmatprep.subr.bf16.mxu0 %v1580
    %2067 = vmatpush1.bf16.msra.mxu0 %v1579
    %2068 = vmatprep.subr.bf16.mxu0 %v1584
    %2069 = vmatpush1.bf16.msra.mxu0 %v1583
    %2070 = vmatprep.subr.bf16.mxu0 %v1588
    %2071 = vmatpush1.bf16.msra.mxu0 %v1587
    %2072 = vmatprep.subr.bf16.mxu0 %v1592
    %2073 = vmatpush1.bf16.msra.mxu0 %v1591
    %2074 = vmatprep.subr.bf16.mxu0 %v1596
    %2075 = vmatpush1.bf16.msra.mxu0 %v1595
    %2076 = vmatprep.subr.bf16.mxu0 %v1600
    %2077 = vmatpush1.bf16.msra.mxu0 %v1599
    %2078 = vmatprep.subr.bf16.mxu0 %v1604
    %2079 = vmatpush1.bf16.msra.mxu0 %v1603
    %2080 = vmatprep.subr.bf16.mxu0 %v1608
    %2081 = vmatpush1.bf16.msra.mxu0 %v1607
    %2082 = vmatprep.subr.bf16.mxu0 %v1612
    %2083 = vmatpush1.bf16.msra.mxu0 %v1611
    %2084 = vmatprep.subr.bf16.mxu0 %v1616
    %2085 = vmatpush1.bf16.msra.mxu0 %v1615
    %2086 = vmatprep.subr.bf16.mxu0 %v1620
    %2087 = vmatpush1.bf16.msra.mxu0 %v1619
    %2088 = vmatprep.subr.bf16.mxu0 %v1624
    %2089 = vmatpush1.bf16.msra.mxu0 %v1623
    %2090 = vmatprep.subr.bf16.mxu0 %v1628
    %2091 = vmatpush1.bf16.msra.mxu0 %v1627
    %2092 = vmatprep.subr.bf16.mxu0 %v1632
    %2093 = vmatpush1.bf16.msra.mxu0 %v1631
    %2094 = vmatprep.subr.bf16.mxu0 %v1636
    %2095 = vmatpush1.bf16.msra.mxu0 %v1635
    %2096 = vmatprep.mubr.bf16.mxu0 %v460
    %2097 = vmatmul.mubr.bf16.gmra.mrb[0].mxu0 %v459
    %v2098 = vpop.f32.mrb[0].mxu0
    %v2099 = vadd.f32 %v2058, %v2098
    %v2100 = vpop.f32.mrb[0].mxu0
    %v2101 = vadd.f32 %v2060, %v2100
    %v2102 = vpop.f32.mrb[0].mxu0
    %v2103 = vpop.f32.mrb[0].mxu0
    %2104 = vdwg.mxu0
    %2105 = vmatprep.subr.bf16.mxu0 %v1640
    %2106 = vmatpush1.bf16.msra.mxu0 %v1639
    %2107 = vmatprep.subr.bf16.mxu0 %v1644
    %2108 = vmatpush1.bf16.msra.mxu0 %v1643
    %2109 = vmatprep.subr.bf16.mxu0 %v1648
    %2110 = vmatpush1.bf16.msra.mxu0 %v1647
    %2111 = vmatprep.subr.bf16.mxu0 %v1652
    %2112 = vmatpush1.bf16.msra.mxu0 %v1651
    %2113 = vmatprep.subr.bf16.mxu0 %v1656
    %2114 = vmatpush1.bf16.msra.mxu0 %v1655
    %2115 = vmatprep.subr.bf16.mxu0 %v1660
    %2116 = vmatpush1.bf16.msra.mxu0 %v1659
    %2117 = vmatprep.subr.bf16.mxu0 %v1664
    %2118 = vmatpush1.bf16.msra.mxu0 %v1663
    %2119 = vmatprep.subr.bf16.mxu0 %v1668
    %2120 = vmatpush1.bf16.msra.mxu0 %v1667
    %2121 = vmatprep.subr.bf16.mxu0 %v1672
    %2122 = vmatpush1.bf16.msra.mxu0 %v1671
    %2123 = vmatprep.subr.bf16.mxu0 %v1676
    %2124 = vmatpush1.bf16.msra.mxu0 %v1675
    %2125 = vmatprep.subr.bf16.mxu0 %v1680
    %2126 = vmatpush1.bf16.msra.mxu0 %v1679
    %2127 = vmatprep.subr.bf16.mxu0 %v1684
    %2128 = vmatpush1.bf16.msra.mxu0 %v1683
    %2129 = vmatprep.subr.bf16.mxu0 %v1688
    %2130 = vmatpush1.bf16.msra.mxu0 %v1687
    %2131 = vmatprep.subr.bf16.mxu0 %v1692
    %2132 = vmatpush1.bf16.msra.mxu0 %v1691
    %2133 = vmatprep.subr.bf16.mxu0 %v1696
    %2134 = vmatpush1.bf16.msra.mxu0 %v1695
    %2135 = vmatprep.subr.bf16.mxu0 %v1700
    %2136 = vmatpush1.bf16.msra.mxu0 %v1699
    %2137 = vmatprep.mubr.bf16.mxu0 %v462
    %2138 = vmatmul.mubr.bf16.gmra.mrb[0].mxu0 %v461
    %v2139 = vpop.f32.mrb[0].mxu0
    %v2140 = vadd.f32 %v2099, %v2139
    %v2141 = vpop.f32.mrb[0].mxu0
    %v2142 = vadd.f32 %v2101, %v2141
    %v2143 = vpop.f32.mrb[0].mxu0
    %v2144 = vpop.f32.mrb[0].mxu0
    %2145 = vdwg.mxu0
    %2146 = vmatprep.subr.bf16.mxu0 %v1704
    %2147 = vmatpush1.bf16.msra.mxu0 %v1703
    %2148 = vmatprep.subr.bf16.mxu0 %v1708
    %2149 = vmatpush1.bf16.msra.mxu0 %v1707
    %2150 = vmatprep.subr.bf16.mxu0 %v1712
    %2151 = vmatpush1.bf16.msra.mxu0 %v1711
    %2152 = vmatprep.subr.bf16.mxu0 %v1716
    %2153 = vmatpush1.bf16.msra.mxu0 %v1715
    %2154 = vmatprep.subr.bf16.mxu0 %v1720
    %2155 = vmatpush1.bf16.msra.mxu0 %v1719
    %2156 = vmatprep.subr.bf16.mxu0 %v1724
    %2157 = vmatpush1.bf16.msra.mxu0 %v1723
    %2158 = vmatprep.subr.bf16.mxu0 %v1728
    %2159 = vmatpush1.bf16.msra.mxu0 %v1727
    %2160 = vmatprep.subr.bf16.mxu0 %v1732
    %2161 = vmatpush1.bf16.msra.mxu0 %v1731
    %2162 = vmatprep.subr.bf16.mxu0 %v1736
    %2163 = vmatpush1.bf16.msra.mxu0 %v1735
    %2164 = vmatprep.subr.bf16.mxu0 %v1740
    %2165 = vmatpush1.bf16.msra.mxu0 %v1739
    %2166 = vmatprep.subr.bf16.mxu0 %v1744
    %2167 = vmatpush1.bf16.msra.mxu0 %v1743
    %2168 = vmatprep.subr.bf16.mxu0 %v1748
    %2169 = vmatpush1.bf16.msra.mxu0 %v1747
    %2170 = vmatprep.subr.bf16.mxu0 %v1752
    %2171 = vmatpush1.bf16.msra.mxu0 %v1751
    %2172 = vmatprep.subr.bf16.mxu0 %v1756
    %2173 = vmatpush1.bf16.msra.mxu0 %v1755
    %2174 = vmatprep.subr.bf16.mxu0 %v1760
    %2175 = vmatpush1.bf16.msra.mxu0 %v1759
    %2176 = vmatprep.subr.bf16.mxu0 %v1764
    %2177 = vmatpush1.bf16.msra.mxu0 %v1763
    %2178 = vmatprep.mubr.bf16.mxu0 %v464
    %2179 = vmatmul.mubr.bf16.gmra.mrb[0].mxu0 %v463
    %v2180 = vpop.f32.mrb[0].mxu0
    %v2181 = vadd.f32 %v2140, %v2180
    %v2182 = vpop.f32.mrb[0].mxu0
    %v2183 = vadd.f32 %v2142, %v2182
    %v2184 = vpop.f32.mrb[0].mxu0
    %v2185 = vpop.f32.mrb[0].mxu0
    %2186 = vdwg.mxu0
    %2187 = vmatprep.subr.bf16.mxu0 %v1514
    %2188 = vmatpush1.bf16.msra.mxu0 %v1513
    %2189 = vmatprep.subr.bf16.mxu0 %v1518
    %2190 = vmatpush1.bf16.msra.mxu0 %v1517
    %2191 = vmatprep.subr.bf16.mxu0 %v1522
    %2192 = vmatpush1.bf16.msra.mxu0 %v1521
    %2193 = vmatprep.subr.bf16.mxu0 %v1526
    %2194 = vmatpush1.bf16.msra.mxu0 %v1525
    %2195 = vmatprep.subr.bf16.mxu0 %v1530
    %2196 = vmatpush1.bf16.msra.mxu0 %v1529
    %2197 = vmatprep.subr.bf16.mxu0 %v1534
    %2198 = vmatpush1.bf16.msra.mxu0 %v1533
    %2199 = vmatprep.subr.bf16.mxu0 %v1538
    %2200 = vmatpush1.bf16.msra.mxu0 %v1537
    %2201 = vmatprep.subr.bf16.mxu0 %v1542
    %2202 = vmatpush1.bf16.msra.mxu0 %v1541
    %2203 = vmatprep.subr.bf16.mxu0 %v1546
    %2204 = vmatpush1.bf16.msra.mxu0 %v1545
    %2205 = vmatprep.subr.bf16.mxu0 %v1550
    %2206 = vmatpush1.bf16.msra.mxu0 %v1549
    %2207 = vmatprep.subr.bf16.mxu0 %v1554
    %2208 = vmatpush1.bf16.msra.mxu0 %v1553
    %2209 = vmatprep.subr.bf16.mxu0 %v1558
    %2210 = vmatpush1.bf16.msra.mxu0 %v1557
    %2211 = vmatprep.subr.bf16.mxu0 %v1562
    %2212 = vmatpush1.bf16.msra.mxu0 %v1561
    %2213 = vmatprep.subr.bf16.mxu0 %v1566
    %2214 = vmatpush1.bf16.msra.mxu0 %v1565
    %2215 = vmatprep.subr.bf16.mxu0 %v1570
    %2216 = vmatpush1.bf16.msra.mxu0 %v1569
    %2217 = vmatprep.subr.bf16.mxu0 %v1574
    %2218 = vmatpush1.bf16.msra.mxu0 %v1573
    %2219 = vmatprep.mubr.bf16.mxu0 %v458
    %2220 = vmatmul.mubr.bf16.gmra.mrb[0].mxu0 %v457
    %v2221 = vpop.f32.mrb[0].mxu0
    %v2222 = vadd.f32 %v734, %v2221
    %v2223 = vpop.f32.mrb[0].mxu0
    %v2224 = vadd.f32 %v738, %v2223
    %v2225 = vpop.f32.mrb[0].mxu0
    %v2226 = vpop.f32.mrb[0].mxu0
    %2227 = vdwg.mxu0
    %2228 = vmatprep.subr.bf16.mxu0 %v1578
    %2229 = vmatpush1.bf16.msra.mxu0 %v1577
    %2230 = vmatprep.subr.bf16.mxu0 %v1582
    %2231 = vmatpush1.bf16.msra.mxu0 %v1581
    %2232 = vmatprep.subr.bf16.mxu0 %v1586
    %2233 = vmatpush1.bf16.msra.mxu0 %v1585
    %2234 = vmatprep.subr.bf16.mxu0 %v1590
    %2235 = vmatpush1.bf16.msra.mxu0 %v1589
    %2236 = vmatprep.subr.bf16.mxu0 %v1594
    %2237 = vmatpush1.bf16.msra.mxu0 %v1593
    %2238 = vmatprep.subr.bf16.mxu0 %v1598
    %2239 = vmatpush1.bf16.msra.mxu0 %v1597
    %2240 = vmatprep.subr.bf16.mxu0 %v1602
    %2241 = vmatpush1.bf16.msra.mxu0 %v1601
    %2242 = vmatprep.subr.bf16.mxu0 %v1606
    %2243 = vmatpush1.bf16.msra.mxu0 %v1605
    %2244 = vmatprep.subr.bf16.mxu0 %v1610
    %2245 = vmatpush1.bf16.msra.mxu0 %v1609
    %2246 = vmatprep.subr.bf16.mxu0 %v1614
    %2247 = vmatpush1.bf16.msra.mxu0 %v1613
    %2248 = vmatprep.subr.bf16.mxu0 %v1618
    %2249 = vmatpush1.bf16.msra.mxu0 %v1617
    %2250 = vmatprep.subr.bf16.mxu0 %v1622
    %2251 = vmatpush1.bf16.msra.mxu0 %v1621
    %2252 = vmatprep.subr.bf16.mxu0 %v1626
    %2253 = vmatpush1.bf16.msra.mxu0 %v1625
    %2254 = vmatprep.subr.bf16.mxu0 %v1630
    %2255 = vmatpush1.bf16.msra.mxu0 %v1629
    %2256 = vmatprep.subr.bf16.mxu0 %v1634
    %2257 = vmatpush1.bf16.msra.mxu0 %v1633
    %2258 = vmatprep.subr.bf16.mxu0 %v1638
    %2259 = vmatpush1.bf16.msra.mxu0 %v1637
    %2260 = vmatprep.mubr.bf16.mxu0 %v460
    %2261 = vmatmul.mubr.bf16.gmra.mrb[0].mxu0 %v459
    %v2262 = vpop.f32.mrb[0].mxu0
    %v2263 = vadd.f32 %v2222, %v2262
    %v2264 = vpop.f32.mrb[0].mxu0
    %v2265 = vadd.f32 %v2224, %v2264
    %v2266 = vpop.f32.mrb[0].mxu0
    %v2267 = vpop.f32.mrb[0].mxu0
    %2268 = vdwg.mxu0
    %2269 = vmatprep.subr.bf16.mxu0 %v1642
    %2270 = vmatpush1.bf16.msra.mxu0 %v1641
    %2271 = vmatprep.subr.bf16.mxu0 %v1646
    %2272 = vmatpush1.bf16.msra.mxu0 %v1645
    %2273 = vmatprep.subr.bf16.mxu0 %v1650
    %2274 = vmatpush1.bf16.msra.mxu0 %v1649
    %2275 = vmatprep.subr.bf16.mxu0 %v1654
    %2276 = vmatpush1.bf16.msra.mxu0 %v1653
    %2277 = vmatprep.subr.bf16.mxu0 %v1658
    %2278 = vmatpush1.bf16.msra.mxu0 %v1657
    %2279 = vmatprep.subr.bf16.mxu0 %v1662
    %2280 = vmatpush1.bf16.msra.mxu0 %v1661
    %2281 = vmatprep.subr.bf16.mxu0 %v1666
    %2282 = vmatpush1.bf16.msra.mxu0 %v1665
    %2283 = vmatprep.subr.bf16.mxu0 %v1670
    %2284 = vmatpush1.bf16.msra.mxu0 %v1669
    %2285 = vmatprep.subr.bf16.mxu0 %v1674
    %2286 = vmatpush1.bf16.msra.mxu0 %v1673
    %2287 = vmatprep.subr.bf16.mxu0 %v1678
    %2288 = vmatpush1.bf16.msra.mxu0 %v1677
    %2289 = vmatprep.subr.bf16.mxu0 %v1682
    %2290 = vmatpush1.bf16.msra.mxu0 %v1681
    %2291 = vmatprep.subr.bf16.mxu0 %v1686
    %2292 = vmatpush1.bf16.msra.mxu0 %v1685
    %2293 = vmatprep.subr.bf16.mxu0 %v1690
    %2294 = vmatpush1.bf16.msra.mxu0 %v1689
    %2295 = vmatprep.subr.bf16.mxu0 %v1694
    %2296 = vmatpush1.bf16.msra.mxu0 %v1693
    %2297 = vmatprep.subr.bf16.mxu0 %v1698
    %2298 = vmatpush1.bf16.msra.mxu0 %v1697
    %2299 = vmatprep.subr.bf16.mxu0 %v1702
    %2300 = vmatpush1.bf16.msra.mxu0 %v1701
    %2301 = vmatprep.mubr.bf16.mxu0 %v462
    %2302 = vmatmul.mubr.bf16.gmra.mrb[0].mxu0 %v461
    %v2303 = vpop.f32.mrb[0].mxu0
    %v2304 = vadd.f32 %v2263, %v2303
    %v2305 = vpop.f32.mrb[0].mxu0
    %v2306 = vadd.f32 %v2265, %v2305
    %v2307 = vpop.f32.mrb[0].mxu0
    %v2308 = vpop.f32.mrb[0].mxu0
    %2309 = vdwg.mxu0
    %2310 = vmatprep.subr.bf16.mxu0 %v1706
    %2311 = vmatpush1.bf16.msra.mxu0 %v1705
    %2312 = vmatprep.subr.bf16.mxu0 %v1710
    %2313 = vmatpush1.bf16.msra.mxu0 %v1709
    %2314 = vmatprep.subr.bf16.mxu0 %v1714
    %2315 = vmatpush1.bf16.msra.mxu0 %v1713
    %2316 = vmatprep.subr.bf16.mxu0 %v1718
    %2317 = vmatpush1.bf16.msra.mxu0 %v1717
    %2318 = vmatprep.subr.bf16.mxu0 %v1722
    %2319 = vmatpush1.bf16.msra.mxu0 %v1721
    %2320 = vmatprep.subr.bf16.mxu0 %v1726
    %2321 = vmatpush1.bf16.msra.mxu0 %v1725
    %2322 = vmatprep.subr.bf16.mxu0 %v1730
    %2323 = vmatpush1.bf16.msra.mxu0 %v1729
    %2324 = vmatprep.subr.bf16.mxu0 %v1734
    %2325 = vmatpush1.bf16.msra.mxu0 %v1733
    %2326 = vmatprep.subr.bf16.mxu0 %v1738
    %2327 = vmatpush1.bf16.msra.mxu0 %v1737
    %2328 = vmatprep.subr.bf16.mxu0 %v1742
    %2329 = vmatpush1.bf16.msra.mxu0 %v1741
    %2330 = vmatprep.subr.bf16.mxu0 %v1746
    %2331 = vmatpush1.bf16.msra.mxu0 %v1745
    %2332 = vmatprep.subr.bf16.mxu0 %v1750
    %2333 = vmatpush1.bf16.msra.mxu0 %v1749
    %2334 = vmatprep.subr.bf16.mxu0 %v1754
    %2335 = vmatpush1.bf16.msra.mxu0 %v1753
    %2336 = vmatprep.subr.bf16.mxu0 %v1758
    %2337 = vmatpush1.bf16.msra.mxu0 %v1757
    %2338 = vmatprep.subr.bf16.mxu0 %v1762
    %2339 = vmatpush1.bf16.msra.mxu0 %v1761
    %2340 = vmatprep.subr.bf16.mxu0 %v1766
    %2341 = vmatpush1.bf16.msra.mxu0 %v1765
    %2342 = vmatprep.mubr.bf16.mxu0 %v464
    %2343 = vmatmul.mubr.bf16.gmra.mrb[0].mxu0 %v463
    %v2344 = vpop.f32.mrb[0].mxu0
    %v2345 = vadd.f32 %v2304, %v2344
    %v2346 = vpop.f32.mrb[0].mxu0
    %v2347 = vadd.f32 %v2306, %v2346
    %v2348 = vpop.f32.mrb[0].mxu0
    %v2349 = vpop.f32.mrb[0].mxu0
    %2350 = vdwg.mxu0
    %v2351 = vmax.f32 %v2181, 0.0
    %v2352 = vmax.f32 %v2183, 0.0
    %v2353 = vmax.f32 %v2345, 0.0
    %v2354 = vmax.f32 %v2347, 0.0
    %v2355 = vpack.c.bf16 %v2351, %v2351
    %v2356 = vpack.c.bf16 %v2352, %v2352
    %v2357 = vpack.c.bf16 %v2353, %v2353
    %v2358 = vpack.c.bf16 %v2354, %v2354
    %v2359 = vld [vmem:[#allocation10] sm:$0xf]
    %v2360 = vld [vmem:[#allocation10 + $0x4] sm:$0xf]
    %v2361 = vld [vmem:[#allocation10 + $0x8] sm:$0xf]
    %v2362 = vld [vmem:[#allocation10 + $0xc] sm:$0xf]
    %v2363 = vld [vmem:[#allocation10 + $0x10] sm:$0xf]
    %v2364 = vld [vmem:[#allocation10 + $0x14] sm:$0xf]
    %v2365 = vld [vmem:[#allocation10 + $0x18] sm:$0xf]
    %v2366 = vld [vmem:[#allocation10 + $0x1c] sm:$0xf]
    %v2367 = vld [vmem:[#allocation10 + $0x20] sm:$0xf]
    %v2368 = vld [vmem:[#allocation10 + $0x24] sm:$0xf]
    %v2369 = vld [vmem:[#allocation10 + $0x28] sm:$0xf]
    %v2370 = vld [vmem:[#allocation10 + $0x2c] sm:$0xf]
    %v2371 = vld [vmem:[#allocation10 + $0x30] sm:$0xf]
    %v2372 = vld [vmem:[#allocation10 + $0x34] sm:$0xf]
    %v2373 = vld [vmem:[#allocation10 + $0x38] sm:$0xf]
    %v2374 = vld [vmem:[#allocation10 + $0x3c] sm:$0xf]
    %v2375 = vld [vmem:[#allocation10 + $0x40] sm:$0xf]
    %v2376 = vld [vmem:[#allocation10 + $0x44] sm:$0xf]
    %v2377 = vld [vmem:[#allocation10 + $0x48] sm:$0xf]
    %v2378 = vld [vmem:[#allocation10 + $0x4c] sm:$0xf]
    %v2379 = vld [vmem:[#allocation10 + $0x50] sm:$0xf]
    %v2380 = vld [vmem:[#allocation10 + $0x54] sm:$0xf]
    %v2381 = vld [vmem:[#allocation10 + $0x58] sm:$0xf]
    %v2382 = vld [vmem:[#allocation10 + $0x5c] sm:$0xf]
    %v2383 = vld [vmem:[#allocation10 + $0x60] sm:$0xf]
    %v2384 = vld [vmem:[#allocation10 + $0x64] sm:$0xf]
    %v2385 = vld [vmem:[#allocation10 + $0x68] sm:$0xf]
    %v2386 = vld [vmem:[#allocation10 + $0x6c] sm:$0xf]
    %v2387 = vld [vmem:[#allocation10 + $0x70] sm:$0xf]
    %v2388 = vld [vmem:[#allocation10 + $0x74] sm:$0xf]
    %v2389 = vld [vmem:[#allocation10 + $0x78] sm:$0xf]
    %v2390 = vld [vmem:[#allocation10 + $0x7c] sm:$0xf]
    %v2391 = vld [vmem:[#allocation10 + $0x80] sm:$0xf]
    %v2392 = vld [vmem:[#allocation10 + $0x84] sm:$0xf]
    %v2393 = vld [vmem:[#allocation10 + $0x88] sm:$0xf]
    %v2394 = vld [vmem:[#allocation10 + $0x8c] sm:$0xf]
    %v2395 = vld [vmem:[#allocation10 + $0x90] sm:$0xf]
    %v2396 = vld [vmem:[#allocation10 + $0x94] sm:$0xf]
    %v2397 = vld [vmem:[#allocation10 + $0x98] sm:$0xf]
    %v2398 = vld [vmem:[#allocation10 + $0x9c] sm:$0xf]
    %v2399 = vld [vmem:[#allocation10 + $0xa0] sm:$0xf]
    %v2400 = vld [vmem:[#allocation10 + $0xa4] sm:$0xf]
    %v2401 = vld [vmem:[#allocation10 + $0xa8] sm:$0xf]
    %v2402 = vld [vmem:[#allocation10 + $0xac] sm:$0xf]
    %v2403 = vld [vmem:[#allocation10 + $0xb0] sm:$0xf]
    %v2404 = vld [vmem:[#allocation10 + $0xb4] sm:$0xf]
    %v2405 = vld [vmem:[#allocation10 + $0xb8] sm:$0xf]
    %v2406 = vld [vmem:[#allocation10 + $0xbc] sm:$0xf]
    %v2407 = vld [vmem:[#allocation10 + $0xc0] sm:$0xf]
    %v2408 = vld [vmem:[#allocation10 + $0xc4] sm:$0xf]
    %v2409 = vld [vmem:[#allocation10 + $0xc8] sm:$0xf]
    %v2410 = vld [vmem:[#allocation10 + $0xcc] sm:$0xf]
    %v2411 = vld [vmem:[#allocation10 + $0xd0] sm:$0xf]
    %v2412 = vld [vmem:[#allocation10 + $0xd4] sm:$0xf]
    %v2413 = vld [vmem:[#allocation10 + $0xd8] sm:$0xf]
    %v2414 = vld [vmem:[#allocation10 + $0xdc] sm:$0xf]
    %v2415 = vld [vmem:[#allocation10 + $0xe0] sm:$0xf]
    %v2416 = vld [vmem:[#allocation10 + $0xe4] sm:$0xf]
    %v2417 = vld [vmem:[#allocation10 + $0xe8] sm:$0xf]
    %v2418 = vld [vmem:[#allocation10 + $0xec] sm:$0xf]
    %v2419 = vld [vmem:[#allocation10 + $0xf0] sm:$0xf]
    %v2420 = vld [vmem:[#allocation10 + $0xf4] sm:$0xf]
    %v2421 = vld [vmem:[#allocation10 + $0xf8] sm:$0xf]
    %v2422 = vld [vmem:[#allocation10 + $0xfc] sm:$0xf]
    %v2423 = vld [vmem:[%s6] sm:$0x1]
    %v2425 = vlaneseq
    %v2426 = vshrl.u32 %v2425, 7
    %v2427 = vsub.s32 0, %v2426
    %v2428 = vrot.slane %v2423, %v2427
    %v2494 = vunpack.c.l.b16 %v2359
    %v2495 = vunpack.c.l.b16 %v2360
    %v2496 = vunpack.c.l.b16 %v2361
    %v2497 = vunpack.c.l.b16 %v2362
    %v2498 = vunpack.c.l.b16 %v2363
    %v2499 = vunpack.c.l.b16 %v2364
    %v2500 = vunpack.c.l.b16 %v2365
    %v2501 = vunpack.c.l.b16 %v2366
    %v2502 = vunpack.c.l.b16 %v2367
    %v2503 = vunpack.c.l.b16 %v2368
    %v2504 = vunpack.c.l.b16 %v2369
    %v2505 = vunpack.c.l.b16 %v2370
    %v2506 = vunpack.c.l.b16 %v2371
    %v2507 = vunpack.c.l.b16 %v2372
    %v2508 = vunpack.c.l.b16 %v2373
    %v2509 = vunpack.c.l.b16 %v2374
    %v2510 = vunpack.c.l.b16 %v2375
    %v2511 = vunpack.c.l.b16 %v2376
    %v2512 = vunpack.c.l.b16 %v2377
    %v2513 = vunpack.c.l.b16 %v2378
    %v2514 = vunpack.c.l.b16 %v2379
    %v2515 = vunpack.c.l.b16 %v2380
    %v2516 = vunpack.c.l.b16 %v2381
    %v2517 = vunpack.c.l.b16 %v2382
    %v2518 = vunpack.c.l.b16 %v2383
    %v2519 = vunpack.c.l.b16 %v2384
    %v2520 = vunpack.c.l.b16 %v2385
    %v2521 = vunpack.c.l.b16 %v2386
    %v2522 = vunpack.c.l.b16 %v2387
    %v2523 = vunpack.c.l.b16 %v2388
    %v2524 = vunpack.c.l.b16 %v2389
    %v2525 = vunpack.c.l.b16 %v2390
    %v2526 = vunpack.c.l.b16 %v2391
    %v2527 = vunpack.c.l.b16 %v2392
    %v2528 = vunpack.c.l.b16 %v2393
    %v2529 = vunpack.c.l.b16 %v2394
    %v2530 = vunpack.c.l.b16 %v2395
    %v2531 = vunpack.c.l.b16 %v2396
    %v2532 = vunpack.c.l.b16 %v2397
    %v2533 = vunpack.c.l.b16 %v2398
    %v2534 = vunpack.c.l.b16 %v2399
    %v2535 = vunpack.c.l.b16 %v2400
    %v2536 = vunpack.c.l.b16 %v2401
    %v2537 = vunpack.c.l.b16 %v2402
    %v2538 = vunpack.c.l.b16 %v2403
    %v2539 = vunpack.c.l.b16 %v2404
    %v2540 = vunpack.c.l.b16 %v2405
    %v2541 = vunpack.c.l.b16 %v2406
    %v2542 = vunpack.c.l.b16 %v2407
    %v2543 = vunpack.c.l.b16 %v2408
    %v2544 = vunpack.c.l.b16 %v2409
    %v2545 = vunpack.c.l.b16 %v2410
    %v2546 = vunpack.c.l.b16 %v2411
    %v2547 = vunpack.c.l.b16 %v2412
    %v2548 = vunpack.c.l.b16 %v2413
    %v2549 = vunpack.c.l.b16 %v2414
    %v2550 = vunpack.c.l.b16 %v2415
    %v2551 = vunpack.c.l.b16 %v2416
    %v2552 = vunpack.c.l.b16 %v2417
    %v2553 = vunpack.c.l.b16 %v2418
    %v2554 = vunpack.c.l.b16 %v2419
    %v2555 = vunpack.c.l.b16 %v2420
    %v2556 = vunpack.c.l.b16 %v2421
    %v2557 = vunpack.c.l.b16 %v2422
    %v2558 = vpack.c.b16 %v2495, %v2494
    %v2559 = vpack.c.b16 %v2497, %v2496
    %v2560 = vpack.c.b16 %v2499, %v2498
    %v2561 = vpack.c.b16 %v2501, %v2500
    %v2562 = vpack.c.b16 %v2503, %v2502
    %v2563 = vpack.c.b16 %v2505, %v2504
    %v2564 = vpack.c.b16 %v2507, %v2506
    %v2565 = vpack.c.b16 %v2509, %v2508
    %v2566 = vpack.c.b16 %v2511, %v2510
    %v2567 = vpack.c.b16 %v2513, %v2512
    %v2568 = vpack.c.b16 %v2515, %v2514
    %v2569 = vpack.c.b16 %v2517, %v2516
    %v2570 = vpack.c.b16 %v2519, %v2518
    %v2571 = vpack.c.b16 %v2521, %v2520
    %v2572 = vpack.c.b16 %v2523, %v2522
    %v2573 = vpack.c.b16 %v2525, %v2524
    %v2574 = vpack.c.b16 %v2527, %v2526
    %v2575 = vpack.c.b16 %v2529, %v2528
    %v2576 = vpack.c.b16 %v2531, %v2530
    %v2577 = vpack.c.b16 %v2533, %v2532
    %v2578 = vpack.c.b16 %v2535, %v2534
    %v2579 = vpack.c.b16 %v2537, %v2536
    %v2580 = vpack.c.b16 %v2539, %v2538
    %v2581 = vpack.c.b16 %v2541, %v2540
    %v2582 = vpack.c.b16 %v2543, %v2542
    %v2583 = vpack.c.b16 %v2545, %v2544
    %v2584 = vpack.c.b16 %v2547, %v2546
    %v2585 = vpack.c.b16 %v2549, %v2548
    %v2586 = vpack.c.b16 %v2551, %v2550
    %v2587 = vpack.c.b16 %v2553, %v2552
    %v2588 = vpack.c.b16 %v2555, %v2554
    %v2589 = vpack.c.b16 %v2557, %v2556
    %2622 = vmatprep.subr.bf16.mxu0 0
    %2623 = vmatpush1.bf16.msra.mxu0 %v2558
    %2624 = vmatprep.subr.bf16.mxu0 0
    %2625 = vmatpush1.bf16.msra.mxu0 %v2559
    %2626 = vmatprep.subr.bf16.mxu0 0
    %2627 = vmatpush1.bf16.msra.mxu0 %v2560
    %2628 = vmatprep.subr.bf16.mxu0 0
    %2629 = vmatpush1.bf16.msra.mxu0 %v2561
    %2630 = vmatprep.subr.bf16.mxu0 0
    %2631 = vmatpush1.bf16.msra.mxu0 %v2562
    %2632 = vmatprep.subr.bf16.mxu0 0
    %2633 = vmatpush1.bf16.msra.mxu0 %v2563
    %2634 = vmatprep.subr.bf16.mxu0 0
    %2635 = vmatpush1.bf16.msra.mxu0 %v2564
    %2636 = vmatprep.subr.bf16.mxu0 0
    %2637 = vmatpush1.bf16.msra.mxu0 %v2565
    %2638 = vmatprep.subr.bf16.mxu0 0
    %2639 = vmatpush1.bf16.msra.mxu0 %v2566
    %2640 = vmatprep.subr.bf16.mxu0 0
    %2641 = vmatpush1.bf16.msra.mxu0 %v2567
    %2642 = vmatprep.subr.bf16.mxu0 0
    %2643 = vmatpush1.bf16.msra.mxu0 %v2568
    %2644 = vmatprep.subr.bf16.mxu0 0
    %2645 = vmatpush1.bf16.msra.mxu0 %v2569
    %2646 = vmatprep.subr.bf16.mxu0 0
    %2647 = vmatpush1.bf16.msra.mxu0 %v2570
    %2648 = vmatprep.subr.bf16.mxu0 0
    %2649 = vmatpush1.bf16.msra.mxu0 %v2571
    %2650 = vmatprep.subr.bf16.mxu0 0
    %2651 = vmatpush1.bf16.msra.mxu0 %v2572
    %2652 = vmatprep.subr.bf16.mxu0 0
    %2653 = vmatpush1.bf16.msra.mxu0 %v2573
    %2654 = vmatprep.mubr.bf16.mxu0 %v2356
    %2655 = vmatmul.mubr.bf16.gmra.mrb[0].mxu0 %v2355
    %v2656 = vpop.f32.mrb[0].mxu0
    %v2657 = vadd.f32 %v2428, %v2656
    %v2658 = vpop.f32.mrb[0].mxu0
    %v2659 = vpop.f32.mrb[0].mxu0
    %v2660 = vpop.f32.mrb[0].mxu0
    %2661 = vdwg.mxu0
    %2662 = vmatprep.subr.bf16.mxu0 0
    %2663 = vmatpush1.bf16.msra.mxu0 %v2574
    %2664 = vmatprep.subr.bf16.mxu0 0
    %2665 = vmatpush1.bf16.msra.mxu0 %v2575
    %2666 = vmatprep.subr.bf16.mxu0 0
    %2667 = vmatpush1.bf16.msra.mxu0 %v2576
    %2668 = vmatprep.subr.bf16.mxu0 0
    %2669 = vmatpush1.bf16.msra.mxu0 %v2577
    %2670 = vmatprep.subr.bf16.mxu0 0
    %2671 = vmatpush1.bf16.msra.mxu0 %v2578
    %2672 = vmatprep.subr.bf16.mxu0 0
    %2673 = vmatpush1.bf16.msra.mxu0 %v2579
    %2674 = vmatprep.subr.bf16.mxu0 0
    %2675 = vmatpush1.bf16.msra.mxu0 %v2580
    %2676 = vmatprep.subr.bf16.mxu0 0
    %2677 = vmatpush1.bf16.msra.mxu0 %v2581
    %2678 = vmatprep.subr.bf16.mxu0 0
    %2679 = vmatpush1.bf16.msra.mxu0 %v2582
    %2680 = vmatprep.subr.bf16.mxu0 0
    %2681 = vmatpush1.bf16.msra.mxu0 %v2583
    %2682 = vmatprep.subr.bf16.mxu0 0
    %2683 = vmatpush1.bf16.msra.mxu0 %v2584
    %2684 = vmatprep.subr.bf16.mxu0 0
    %2685 = vmatpush1.bf16.msra.mxu0 %v2585
    %2686 = vmatprep.subr.bf16.mxu0 0
    %2687 = vmatpush1.bf16.msra.mxu0 %v2586
    %2688 = vmatprep.subr.bf16.mxu0 0
    %2689 = vmatpush1.bf16.msra.mxu0 %v2587
    %2690 = vmatprep.subr.bf16.mxu0 0
    %2691 = vmatpush1.bf16.msra.mxu0 %v2588
    %2692 = vmatprep.subr.bf16.mxu0 0
    %2693 = vmatpush1.bf16.msra.mxu0 %v2589
    %2694 = vmatprep.mubr.bf16.mxu0 %v2358
    %2695 = vmatmul.mubr.bf16.gmra.mrb[0].mxu0 %v2357
    %v2696 = vpop.f32.mrb[0].mxu0
    %v2697 = vadd.f32 %v2657, %v2696
    %v2698 = vpop.f32.mrb[0].mxu0
    %v2699 = vpop.f32.mrb[0].mxu0
    %v2700 = vpop.f32.mrb[0].mxu0
    %2701 = vdwg.mxu0
    %2702 = vst [vmem:[#allocation11] sm:$0xff] %v2697
    // Predicated region
    $region50: #{residualnet_forward.1} parent=1 // pred_check
      _
    $region51: #{residualnet_forward.1} parent=1 // pred_check_branch
      %2704 = sbr.rel (0) target = $region53
    $region52: #{residualnet_forward.1} parent=1 // pred_region
      %s2706 = ssub.s32 128, 128
      %2707 = vsyncadd [#allocation4], %s2706
      %s2709 = sshll.u32 [#allocation11], 4
      %s2710 = int_to_ptr.vmem [resolvable:$true] %s2709
      %2712 = dma.vmem_to_hbm [thread:$0]  %s2710, 128, %s7, [#allocation4]
    $region53: #{residualnet_forward.1} parent=1 // pred_fallthru
      _
    // Predicated region
    $region54: #{residualnet_forward.1} parent=1 // pred_check
      _
    $region55: #{residualnet_forward.1} parent=1 // pred_check_branch
      %2714 = sbr.rel (0) target = $region57
    $region56: #{residualnet_forward.1} parent=1 // pred_region
      %2715 = dma.done [#allocation4], 128
    $region57: #{residualnet_forward.1} parent=1 // pred_fallthru
      _
    %2716 = vsyncpa [#allocation3], 1
    %2717 = vsyncpa [#allocation6], 1
    %2718 = vsyncpa [#allocation9], 1
    %2719 = vsyncpa [#allocation4], 1

</llo_original>
